<compile_context>
chip_gen: v5e
topology: v5e:2x2
jax: 0.10.0
libtpu: 0.0.40
codegen_flags: <defaults>
</compile_context>

<pallas_src>
import functools
import math

import jax
import jax.numpy as jnp
from jax.experimental import pallas as pl
from jax.experimental.pallas import tpu as pltpu


_F32_MASK = -0.5 * float(jnp.finfo(jnp.float32).max)  # dtype-aware "−inf" fill


def _pick_tile(dim, preferred):
    """Tile size: whole dim if small, else `preferred` (fail loudly otherwise)."""
    if dim <= preferred:
        return dim
    if dim % preferred != 0:
        raise ValueError(f"dim {dim} not divisible by tile {preferred}; pad the input")
    return preferred


# ----------------------------- Pallas kernels ------------------------------

def _attn_block_kernel(x_ref, nw_ref, wqkv_ref, wo_ref, cos_ref, sin_ref, o_ref,
                       *, n_head, head_dim, eps):
    """Fused RMSNorm -> QKV projection -> RoPE -> causal SDPA (heads batched)
    -> Wo projection -> residual add, for one batch element."""
    x = x_ref[...].astype(jnp.float32)               # (S, D) residual stream
    S, D = x.shape
    hd2 = head_dim // 2

    # RMSNorm (f32)
    ms = jnp.mean(x * x, axis=-1, keepdims=True)
    h = ((x * jax.lax.rsqrt(ms + eps)) * nw_ref[...]).astype(jnp.bfloat16)

    # QKV projection: columns = [q | k | v]  (bf16 MXU, f32 acc).
    # 1/sqrt(head_dim) is already folded into the q weight columns.
    proj = jnp.dot(h, wqkv_ref[...], preferred_element_type=jnp.float32)  # (S, 3D)

    def split_heads(m):                               # (S, D) -> (H, S, hd)
        return jnp.concatenate(
            [m[None, :, hh * head_dim:(hh + 1) * head_dim] for hh in range(n_head)],
            axis=0)

    q = split_heads(proj[:, 0:D])
    k = split_heads(proj[:, D:2 * D])
    v = split_heads(proj[:, 2 * D:3 * D]).astype(jnp.bfloat16)

    # RoPE in rotate_half form (weights were permuted at init so this matches
    # the interleaved PyTorch RoPE exactly for the attention output).
    cos = cos_ref[...]                                # (S, hd2)
    sin = sin_ref[...]                                # (S, hd2)

    def rope(t):                                      # (H, S, hd) -> (H, S, hd)
        t1 = t[..., :hd2]
        t2 = t[..., hd2:]
        return jnp.concatenate([t1 * cos - t2 * sin, t2 * cos + t1 * sin], axis=-1)

    q = rope(q).astype(jnp.bfloat16)
    k = rope(k).astype(jnp.bfloat16)

    # Causal mask built in-kernel (prefill: query index == absolute position).
    row = jax.lax.broadcasted_iota(jnp.int32, (S, S), 0)
    col = jax.lax.broadcasted_iota(jnp.int32, (S, S), 1)
    causal = col <= row                               # (S, S), broadcasts over H

    # Batched SDPA over all heads (two MXU contractions, no per-head loop).
    s = jnp.einsum("hqd,hkd->hqk", q, k,
                   preferred_element_type=jnp.float32)            # (H, S, S)
    s = jnp.where(causal, s, _F32_MASK)
    s = s - jnp.max(s, axis=-1, keepdims=True)
    p = jnp.exp(s)
    # Approximate reciprocal for the softmax denominator (documented deviation:
    # rows sum to 1 only to ~1e-3/1e-4 relative accuracy; fine for inference).
    p = p * pl.reciprocal(jnp.sum(p, axis=-1, keepdims=True), approx=True)
    o = jnp.einsum("hqk,hkd->hqd", p.astype(jnp.bfloat16), v,
                   preferred_element_type=jnp.float32)            # (H, S, hd)

    # Re-pack heads into a lane-dense (S, D) slab for the Wo projection.
    attn = jnp.concatenate([o[hh] for hh in range(n_head)],
                           axis=-1).astype(jnp.bfloat16)          # (S, D)

    y = x + jnp.dot(attn, wo_ref[...], preferred_element_type=jnp.float32)
    o_ref[...] = y.astype(o_ref.dtype)


def _ffn_block_kernel(x_ref, nw_ref, w1_ref, w3_ref, w2_ref, o_ref,
                      h_scr, acc_scr, *, eps):
    """Fused RMSNorm -> SwiGLU FFN -> residual add for a tile of rows,
    with the intermediate (I) dimension tiled as a reduction grid axis."""
    j = pl.program_id(1)

    @pl.when(j == 0)
    def _():
        x = x_ref[...].astype(jnp.float32)            # (tm, D)
        ms = jnp.mean(x * x, axis=-1, keepdims=True)
        h_scr[...] = ((x * jax.lax.rsqrt(ms + eps)) * nw_ref[...]).astype(jnp.bfloat16)
        acc_scr[...] = x                               # residual init (f32)

    h = h_scr[...]                                    # (tm, D) bf16
    a = jnp.dot(h, w1_ref[...], preferred_element_type=jnp.float32)   # (tm, ti)
    b = jnp.dot(h, w3_ref[...], preferred_element_type=jnp.float32)   # (tm, ti)
    # Exact silu via tanh (numerically safe; no exp overflow, no approx recip).
    silu = a * (0.5 * (jnp.tanh(0.5 * a) + 1.0))
    u = (silu * b).astype(jnp.bfloat16)
    acc_scr[...] += jnp.dot(u, w2_ref[...], preferred_element_type=jnp.float32)

    @pl.when(j == pl.num_programs(1) - 1)
    def _():
        o_ref[...] = acc_scr[...].astype(o_ref.dtype)


def _head_kernel(x_ref, nw_ref, wout_ref, o_ref, *, eps):
    """Fused final RMSNorm -> output (lm-head) projection for one (row, vocab)
    tile.  The norm is recomputed per vocab tile (negligible VPU work)."""
    x = x_ref[...].astype(jnp.float32)
    ms = jnp.mean(x * x, axis=-1, keepdims=True)
    h = ((x * jax.lax.rsqrt(ms + eps)) * nw_ref[...]).astype(jnp.bfloat16)
    o_ref[...] = jnp.dot(h, wout_ref[...], preferred_element_type=jnp.float32)


# ------------------------------ pallas_call glue ----------------------------

def attention_block(x3d, norm_w, wqkv_t, wo_t, cos_h, sin_h, *, n_head, eps):
    B, S, D = x3d.shape
    head_dim = D // n_head
    hd2 = head_dim // 2
    kernel = functools.partial(_attn_block_kernel, n_head=n_head,
                               head_dim=head_dim, eps=eps)
    return pl.pallas_call(
        kernel,
        out_shape=jax.ShapeDtypeStruct((B, S, D), jnp.bfloat16),
        grid=(B,),
        in_specs=[
            pl.BlockSpec((None, S, D), lambda b: (b, 0, 0)),   # x (bf16 residual)
            pl.BlockSpec((1, D), lambda b: (0, 0)),            # attn norm weight
            pl.BlockSpec((D, 3 * D), lambda b: (0, 0)),        # [q|k|v] weight (D,3D)
            pl.BlockSpec((D, D), lambda b: (0, 0)),            # Wo^T
            pl.BlockSpec((S, hd2), lambda b: (0, 0)),          # cos (per head_dim/2)
            pl.BlockSpec((S, hd2), lambda b: (0, 0)),          # sin
        ],
        out_specs=pl.BlockSpec((None, S, D), lambda b: (b, 0, 0)),
        compiler_params=pltpu.CompilerParams(dimension_semantics=("parallel",)),
    )(x3d, norm_w, wqkv_t, wo_t, cos_h, sin_h)


def ffn_block(x2d, norm_w, w1_t, w3_t, w2_t, *, eps, tm=256, ti=512):
    M, D = x2d.shape
    I = w1_t.shape[1]
    tm = _pick_tile(M, tm)
    ti = _pick_tile(I, ti)
    kernel = functools.partial(_ffn_block_kernel, eps=eps)
    return pl.pallas_call(
        kernel,
        out_shape=jax.ShapeDtypeStruct((M, D), jnp.bfloat16),
        grid=(M // tm, I // ti),
        in_specs=[
            pl.BlockSpec((tm, D), lambda i, j: (i, 0)),   # x (bf16 residual)
            pl.BlockSpec((1, D), lambda i, j: (0, 0)),    # ffn norm weight
            pl.BlockSpec((D, ti), lambda i, j: (0, j)),   # w1^T  tile over I
            pl.BlockSpec((D, ti), lambda i, j: (0, j)),   # w3^T  tile over I
            pl.BlockSpec((ti, D), lambda i, j: (j, 0)),   # w2^T  tile over I (K)
        ],
        out_specs=pl.BlockSpec((tm, D), lambda i, j: (i, 0)),
        scratch_shapes=[pltpu.VMEM((tm, D), jnp.bfloat16),   # normed activations
                        pltpu.VMEM((tm, D), jnp.float32)],   # residual accumulator
        compiler_params=pltpu.CompilerParams(
            dimension_semantics=("parallel", "arbitrary"),
            vmem_limit_bytes=48 * 1024 * 1024),
    )(x2d, norm_w, w1_t, w3_t, w2_t)


def lm_head(x2d, norm_w, wout_t, *, eps, tm=256, tv=2048):
    M, D = x2d.shape
    V = wout_t.shape[1]
    tm = _pick_tile(M, tm)
    tv = _pick_tile(V, tv)
    kernel = functools.partial(_head_kernel, eps=eps)
    return pl.pallas_call(
        kernel,
        out_shape=jax.ShapeDtypeStruct((M, V), jnp.float32),
        grid=(M // tm, V // tv),
        in_specs=[
            pl.BlockSpec((tm, D), lambda i, j: (i, 0)),
            pl.BlockSpec((1, D), lambda i, j: (0, 0)),
            pl.BlockSpec((D, tv), lambda i, j: (0, j)),
        ],
        out_specs=pl.BlockSpec((tm, tv), lambda i, j: (i, j)),
        compiler_params=pltpu.CompilerParams(
            dimension_semantics=("parallel", "parallel"),
            vmem_limit_bytes=48 * 1024 * 1024),
    )(x2d, norm_w, wout_t)


# -------------------------------- model glue --------------------------------

class Config:
    dim = 32
    n_head = 4
    n_layer = 2
    vocab_size = 64
    intermediate_size = 64
    block_size = 16
    rope_base = 10000.0
    norm_eps = 1e-5


def _rotate_half_perm(D, n_head):
    """Per-head permutation [even features | odd features]: converting the
    interleaved-RoPE weight layout to rotate_half layout (q·k is invariant)."""
    hd = D // n_head
    idx = []
    for h in range(n_head):
        base = h * hd
        idx.extend(base + 2 * i for i in range(hd // 2))
        idx.extend(base + 2 * i + 1 for i in range(hd // 2))
    return jnp.array(idx, jnp.int32)


def rope_tables(input_pos, head_dim, base):
    """cos/sin tables of shape (S, head_dim // 2); broadcast over heads in-kernel."""
    freqs = 1.0 / (base ** (jnp.arange(0, head_dim, 2, dtype=jnp.float32) / head_dim))
    ang = jnp.outer(input_pos.astype(jnp.float32), freqs)        # (S, head_dim//2)
    return jnp.cos(ang), jnp.sin(ang)


def init_params(cfg, key):
    D, V, I = cfg.dim, cfg.vocab_size, cfg.intermediate_size
    head_dim = D // cfg.n_head
    n_keys = 2 + 5 * cfg.n_layer
    keys = iter(jax.random.split(key, n_keys))

    def w(shape):
        return jax.random.normal(next(keys), shape, jnp.float32) * 0.02

    perm = _rotate_half_perm(D, cfg.n_head)
    scale = 1.0 / math.sqrt(head_dim)

    params = {
        "tok_emb": w((V, D)).astype(jnp.bfloat16),
        "output_w_t": w((V, D)).T.astype(jnp.bfloat16),   # pre-transposed (D, V)
        "norm_w": jnp.ones((1, D), jnp.float32),
        "layers": [],
    }
    for _ in range(cfg.n_layer):
        wqkv = w((3 * D, D))                               # PyTorch (out, in) layout
        wq, wk, wv = jnp.split(wqkv, 3, axis=0)
        wq = wq[perm] * scale                              # rotate_half layout + folded scale
        wk = wk[perm]
        wqkv_t = jnp.concatenate([wq.T, wk.T, wv.T], axis=1)     # (D, 3D)
        params["layers"].append({
            "attn_norm_w": jnp.ones((1, D), jnp.float32),
            "wqkv_t": wqkv_t.astype(jnp.bfloat16),
            "wo_t": w((D, D)).T.astype(jnp.bfloat16),
            "ffn_norm_w": jnp.ones((1, D), jnp.float32),
            "w1_t": w((I, D)).T.astype(jnp.bfloat16),
            "w3_t": w((I, D)).T.astype(jnp.bfloat16),
            "w2_t": w((D, I)).T.astype(jnp.bfloat16),
        })
    return params


def transformer_forward(cfg, params, idx, input_pos):
    B, S = idx.shape
    D, H = cfg.dim, cfg.n_head
    Hd = D // H

    cos_h, sin_h = rope_tables(input_pos, Hd, cfg.rope_base)     # (S, Hd//2) each

    x = params["tok_emb"][idx]                                   # (B, S, D) bf16 gather (glue)
    for lp in params["layers"]:
        x = attention_block(x, lp["attn_norm_w"], lp["wqkv_t"], lp["wo_t"],
                            cos_h, sin_h, n_head=H, eps=cfg.norm_eps)
        x2d = ffn_block(x.reshape(B * S, D), lp["ffn_norm_w"],
                        lp["w1_t"], lp["w3_t"], lp["w2_t"], eps=cfg.norm_eps)
        x = x2d.reshape(B, S, D)

    logits = lm_head(x.reshape(B * S, D), params["norm_w"],
                     params["output_w_t"], eps=cfg.norm_eps)
    return logits.reshape(B, S, cfg.vocab_size)


if __name__ == "__main__":
    cfg = Config()
    key = jax.random.PRNGKey(0)
    pkey, ikey = jax.random.split(key)
    params = init_params(cfg, pkey)

    B, S = 2, 8
    idx = jax.random.randint(ikey, (B, S), 0, cfg.vocab_size, dtype=jnp.int32)
    input_pos = jnp.arange(S, dtype=jnp.int32)

    fwd = jax.jit(functools.partial(transformer_forward, cfg))
    logits = fwd(params, idx, input_pos)
    jax.block_until_ready(logits)
    assert logits.shape == (B, S, cfg.vocab_size)
    assert bool(jnp.all(jnp.isfinite(logits)))
    print("KERNEL_OK")
</pallas_src>

<mosaic_0001>
module attributes {stable_mosaic.version = 11 : i64} {
  func.func @_ffn_block_kernel(%arg0: i32, %arg1: i32, %arg2: memref<16x32xbf16, #tpu.memory_space<vmem>>, %arg3: memref<1x32xf32, #tpu.memory_space<vmem>>, %arg4: memref<32x64xbf16, #tpu.memory_space<vmem>>, %arg5: memref<32x64xbf16, #tpu.memory_space<vmem>>, %arg6: memref<64x32xbf16, #tpu.memory_space<vmem>>, %arg7: memref<16x32xbf16, #tpu.memory_space<vmem>>, %arg8: memref<16x32xbf16, #tpu.memory_space<vmem>>, %arg9: memref<16x32xf32, #tpu.memory_space<vmem>>) attributes {dimension_semantics = [#tpu.dimension_semantics<parallel>, #tpu.dimension_semantics<arbitrary>], iteration_bounds = array<i64: 1, 1>, scalar_prefetch = 0 : i64, scratch_operands = 2 : i64, tpu.core_type = #tpu.core_type<tc>, window_params = [{transform_indices = @transform_0, window_bounds = array<i64: 16, 32>}, {pipeline_mode = #tpu.pipeline_mode<synchronous>, transform_indices = @transform_1, window_bounds = array<i64: 1, 32>}, {transform_indices = @transform_2, window_bounds = array<i64: 32, 64>}, {transform_indices = @transform_3, window_bounds = array<i64: 32, 64>}, {transform_indices = @transform_4, window_bounds = array<i64: 64, 32>}, {transform_indices = @transform_5, window_bounds = array<i64: 16, 32>}]} {
    %c0_i32 = arith.constant 0 : i32
    %0 = arith.cmpi eq, %arg1, %c0_i32 : i32
    %1 = arith.extui %0 : i1 to i32
    %c0_i32_0 = arith.constant 0 : i32
    %2 = arith.cmpi ne, %1, %c0_i32_0 : i32
    scf.if %2 {
      %c0_19 = arith.constant 0 : index
      %c0_20 = arith.constant 0 : index
      %26 = vector.load %arg2[%c0_19, %c0_20] : memref<16x32xbf16, #tpu.memory_space<vmem>>, vector<16x32xbf16>
      %27 = arith.extf %26 : vector<16x32xbf16> to vector<16x32xf32>
      %28 = arith.mulf %27, %27 : vector<16x32xf32>
      %cst_21 = arith.constant dense<0.000000e+00> : vector<16xf32>
      %29 = vector.multi_reduction <add>, %28, %cst_21 [1] : vector<16x32xf32> to vector<16xf32>
      %30 = vector.shape_cast %29 : vector<16xf32> to vector<16x1xf32>
      %cst_22 = arith.constant 3.200000e+01 : f32
      %31 = vector.broadcast %cst_22 : f32 to vector<16x1xf32>
      %32 = arith.divf %30, %31 : vector<16x1xf32>
      %cst_23 = arith.constant 9.99999974E-6 : f32
      %33 = vector.broadcast %cst_23 : f32 to vector<16x1xf32>
      %34 = arith.addf %32, %33 : vector<16x1xf32>
      %35 = math.rsqrt %34 : vector<16x1xf32>
      %36 = vector.broadcast %35 : vector<16x1xf32> to vector<16x32xf32>
      %37 = arith.mulf %27, %36 : vector<16x32xf32>
      %c0_24 = arith.constant 0 : index
      %c0_25 = arith.constant 0 : index
      %38 = vector.load %arg3[%c0_24, %c0_25] : memref<1x32xf32, #tpu.memory_space<vmem>>, vector<1x32xf32>
      %39 = vector.broadcast %38 : vector<1x32xf32> to vector<16x32xf32>
      %40 = arith.mulf %37, %39 : vector<16x32xf32>
      %41 = arith.truncf %40 : vector<16x32xf32> to vector<16x32xbf16>
      %c0_26 = arith.constant 0 : index
      %c0_27 = arith.constant 0 : index
      %42 = vector.load %arg8[%c0_26, %c0_27] : memref<16x32xbf16, #tpu.memory_space<vmem>>, vector<16x32xbf16>
      tpu.vector_store %arg8[%c0_26, %c0_27], %41 {strides = array<i32>} : memref<16x32xbf16, #tpu.memory_space<vmem>>, vector<16x32xbf16>,
      %c0_28 = arith.constant 0 : index
      %c0_29 = arith.constant 0 : index
      %43 = vector.load %arg9[%c0_28, %c0_29] : memref<16x32xf32, #tpu.memory_space<vmem>>, vector<16x32xf32>
      tpu.vector_store %arg9[%c0_28, %c0_29], %27 {strides = array<i32>} : memref<16x32xf32, #tpu.memory_space<vmem>>, vector<16x32xf32>,
    } else {
    }
    %c0 = arith.constant 0 : index
    %c0_1 = arith.constant 0 : index
    %3 = vector.load %arg8[%c0, %c0_1] : memref<16x32xbf16, #tpu.memory_space<vmem>>, vector<16x32xbf16>
    %c0_2 = arith.constant 0 : index
    %c0_3 = arith.constant 0 : index
    %4 = vector.load %arg4[%c0_2, %c0_3] : memref<32x64xbf16, #tpu.memory_space<vmem>>, vector<32x64xbf16>
    %cst = arith.constant dense<0.000000e+00> : vector<16x64xf32>
    %5 = tpu.matmul %3, %4, %cst {dimension_numbers = #tpu.dot_dimension_numbers<[1], [0], [0], [1], [0, 0, 1, 1], [], []>} : vector<16x32xbf16>, vector<32x64xbf16>, vector<16x64xf32> -> vector<16x64xf32>
    %c0_4 = arith.constant 0 : index
    %c0_5 = arith.constant 0 : index
    %6 = vector.load %arg5[%c0_4, %c0_5] : memref<32x64xbf16, #tpu.memory_space<vmem>>, vector<32x64xbf16>
    %cst_6 = arith.constant dense<0.000000e+00> : vector<16x64xf32>
    %7 = tpu.matmul %3, %6, %cst_6 {dimension_numbers = #tpu.dot_dimension_numbers<[1], [0], [0], [1], [0, 0, 1, 1], [], []>} : vector<16x32xbf16>, vector<32x64xbf16>, vector<16x64xf32> -> vector<16x64xf32>
    %cst_7 = arith.constant 5.000000e-01 : f32
    %8 = vector.broadcast %cst_7 : f32 to vector<16x64xf32>
    %9 = arith.mulf %8, %5 : vector<16x64xf32>
    %10 = math.tanh %9 : vector<16x64xf32>
    %cst_8 = arith.constant 1.000000e+00 : f32
    %11 = vector.broadcast %cst_8 : f32 to vector<16x64xf32>
    %12 = arith.addf %10, %11 : vector<16x64xf32>
    %cst_9 = arith.constant 5.000000e-01 : f32
    %13 = vector.broadcast %cst_9 : f32 to vector<16x64xf32>
    %14 = arith.mulf %13, %12 : vector<16x64xf32>
    %15 = arith.mulf %5, %14 : vector<16x64xf32>
    %16 = arith.mulf %15, %7 : vector<16x64xf32>
    %17 = arith.truncf %16 : vector<16x64xf32> to vector<16x64xbf16>
    %c0_10 = arith.constant 0 : index
    %c0_11 = arith.constant 0 : index
    %18 = vector.load %arg9[%c0_10, %c0_11] : memref<16x32xf32, #tpu.memory_space<vmem>>, vector<16x32xf32>
    %c0_12 = arith.constant 0 : index
    %c0_13 = arith.constant 0 : index
    %19 = vector.load %arg6[%c0_12, %c0_13] : memref<64x32xbf16, #tpu.memory_space<vmem>>, vector<64x32xbf16>
    %cst_14 = arith.constant dense<0.000000e+00> : vector<16x32xf32>
    %20 = tpu.matmul %17, %19, %cst_14 {dimension_numbers = #tpu.dot_dimension_numbers<[1], [0], [0], [1], [0, 0, 1, 1], [], []>} : vector<16x64xbf16>, vector<64x32xbf16>, vector<16x32xf32> -> vector<16x32xf32>
    %21 = arith.addf %18, %20 : vector<16x32xf32>
    %c0_15 = arith.constant 0 : index
    %c0_16 = arith.constant 0 : index
    %22 = vector.load %arg9[%c0_15, %c0_16] : memref<16x32xf32, #tpu.memory_space<vmem>>, vector<16x32xf32>
    tpu.vector_store %arg9[%c0_15, %c0_16], %21 {strides = array<i32>} : memref<16x32xf32, #tpu.memory_space<vmem>>, vector<16x32xf32>,
    %c0_i32_17 = arith.constant 0 : i32
    %23 = arith.cmpi eq, %arg1, %c0_i32_17 : i32
    %24 = arith.extui %23 : i1 to i32
    %c0_i32_18 = arith.constant 0 : i32
    %25 = arith.cmpi ne, %24, %c0_i32_18 : i32
    scf.if %25 {
      %c0_19 = arith.constant 0 : index
      %c0_20 = arith.constant 0 : index
      %26 = vector.load %arg9[%c0_19, %c0_20] : memref<16x32xf32, #tpu.memory_space<vmem>>, vector<16x32xf32>
      %27 = arith.truncf %26 : vector<16x32xf32> to vector<16x32xbf16>
      %c0_21 = arith.constant 0 : index
      %c0_22 = arith.constant 0 : index
      %28 = vector.load %arg7[%c0_21, %c0_22] : memref<16x32xbf16, #tpu.memory_space<vmem>>, vector<16x32xbf16>
      tpu.vector_store %arg7[%c0_21, %c0_22], %27 {strides = array<i32>} : memref<16x32xbf16, #tpu.memory_space<vmem>>, vector<16x32xbf16>,
    } else {
    }
    return
  }
  func.func @transform_0(%arg0: i32, %arg1: i32) -> (i32, i32) {
    %c0_i32 = arith.constant 0 : i32
    %c0_i32_0 = arith.constant 0 : i32
    return %arg0, %c0_i32 : i32, i32
  }
  func.func @transform_1(%arg0: i32, %arg1: i32) -> (i32, i32) {
    %c0_i32 = arith.constant 0 : i32
    %c0_i32_0 = arith.constant 0 : i32
    %c0_i32_1 = arith.constant 0 : i32
    return %c0_i32, %c0_i32_0 : i32, i32
  }
  func.func @transform_2(%arg0: i32, %arg1: i32) -> (i32, i32) {
    %c0_i32 = arith.constant 0 : i32
    %c0_i32_0 = arith.constant 0 : i32
    return %c0_i32, %arg1 : i32, i32
  }
  func.func @transform_3(%arg0: i32, %arg1: i32) -> (i32, i32) {
    %c0_i32 = arith.constant 0 : i32
    %c0_i32_0 = arith.constant 0 : i32
    return %c0_i32, %arg1 : i32, i32
  }
  func.func @transform_4(%arg0: i32, %arg1: i32) -> (i32, i32) {
    %c0_i32 = arith.constant 0 : i32
    %c0_i32_0 = arith.constant 0 : i32
    return %arg1, %c0_i32 : i32, i32
  }
  func.func @transform_5(%arg0: i32, %arg1: i32) -> (i32, i32) {
    %c0_i32 = arith.constant 0 : i32
    %c0_i32_0 = arith.constant 0 : i32
    return %arg0, %c0_i32 : i32, i32
  }
}

module attributes {stable_mosaic.version = 11 : i64} {
  func.func @_attn_block_kernel(%arg0: i32, %arg1: memref<1x8x32xbf16, #tpu.memory_space<vmem>>, %arg2: memref<1x32xf32, #tpu.memory_space<vmem>>, %arg3: memref<32x96xbf16, #tpu.memory_space<vmem>>, %arg4: memref<32x32xbf16, #tpu.memory_space<vmem>>, %arg5: memref<8x4xf32, #tpu.memory_space<vmem>>, %arg6: memref<8x4xf32, #tpu.memory_space<vmem>>, %arg7: memref<1x8x32xbf16, #tpu.memory_space<vmem>>) attributes {dimension_semantics = [#tpu.dimension_semantics<parallel>], iteration_bounds = array<i64: 2>, scalar_prefetch = 0 : i64, scratch_operands = 0 : i64, tpu.core_type = #tpu.core_type<tc>, window_params = [{transform_indices = @transform_0, window_bounds = array<i64: 1, 8, 32>}, {pipeline_mode = #tpu.pipeline_mode<synchronous>, transform_indices = @transform_1, window_bounds = array<i64: 1, 32>}, {pipeline_mode = #tpu.pipeline_mode<synchronous>, transform_indices = @transform_2, window_bounds = array<i64: 32, 96>}, {pipeline_mode = #tpu.pipeline_mode<synchronous>, transform_indices = @transform_3, window_bounds = array<i64: 32, 32>}, {pipeline_mode = #tpu.pipeline_mode<synchronous>, transform_indices = @transform_4, window_bounds = array<i64: 8, 4>}, {pipeline_mode = #tpu.pipeline_mode<synchronous>, transform_indices = @transform_5, window_bounds = array<i64: 8, 4>}, {transform_indices = @transform_6, window_bounds = array<i64: 1, 8, 32>}]} {
    %c0 = arith.constant 0 : index
    %c0_0 = arith.constant 0 : index
    %c0_1 = arith.constant 0 : index
    %0 = vector.load %arg1[%c0, %c0_0, %c0_1] : memref<1x8x32xbf16, #tpu.memory_space<vmem>>, vector<1x8x32xbf16>
    %1 = vector.shape_cast %0 : vector<1x8x32xbf16> to vector<8x32xbf16>
    %2 = arith.extf %1 : vector<8x32xbf16> to vector<8x32xf32>
    %3 = arith.mulf %2, %2 : vector<8x32xf32>
    %cst = arith.constant dense<0.000000e+00> : vector<8xf32>
    %4 = vector.multi_reduction <add>, %3, %cst [1] : vector<8x32xf32> to vector<8xf32>
    %5 = vector.shape_cast %4 : vector<8xf32> to vector<8x1xf32>
    %cst_2 = arith.constant 3.200000e+01 : f32
    %6 = vector.broadcast %cst_2 : f32 to vector<8x1xf32>
    %7 = arith.divf %5, %6 : vector<8x1xf32>
    %cst_3 = arith.constant 9.99999974E-6 : f32
    %8 = vector.broadcast %cst_3 : f32 to vector<8x1xf32>
    %9 = arith.addf %7, %8 : vector<8x1xf32>
    %10 = math.rsqrt %9 : vector<8x1xf32>
    %11 = vector.broadcast %10 : vector<8x1xf32> to vector<8x32xf32>
    %12 = arith.mulf %2, %11 : vector<8x32xf32>
    %c0_4 = arith.constant 0 : index
    %c0_5 = arith.constant 0 : index
    %13 = vector.load %arg2[%c0_4, %c0_5] : memref<1x32xf32, #tpu.memory_space<vmem>>, vector<1x32xf32>
    %14 = vector.broadcast %13 : vector<1x32xf32> to vector<8x32xf32>
    %15 = arith.mulf %12, %14 : vector<8x32xf32>
    %16 = arith.truncf %15 : vector<8x32xf32> to vector<8x32xbf16>
    %c0_6 = arith.constant 0 : index
    %c0_7 = arith.constant 0 : index
    %17 = vector.load %arg3[%c0_6, %c0_7] : memref<32x96xbf16, #tpu.memory_space<vmem>>, vector<32x96xbf16>
    %cst_8 = arith.constant dense<0.000000e+00> : vector<8x96xf32>
    %18 = tpu.matmul %16, %17, %cst_8 {dimension_numbers = #tpu.dot_dimension_numbers<[1], [0], [0], [1], [0, 0, 1, 1], [], []>} : vector<8x32xbf16>, vector<32x96xbf16>, vector<8x96xf32> -> vector<8x96xf32>
    %19 = vector.extract_strided_slice %18 {offsets = [0, 0], sizes = [8, 32], strides = [1, 1]} : vector<8x96xf32> to vector<8x32xf32>
    %20 = vector.extract_strided_slice %19 {offsets = [0, 0], sizes = [8, 8], strides = [1, 1]} : vector<8x32xf32> to vector<8x8xf32>
    %21 = vector.shape_cast %20 : vector<8x8xf32> to vector<1x8x8xf32>
    %22 = vector.extract_strided_slice %19 {offsets = [0, 8], sizes = [8, 8], strides = [1, 1]} : vector<8x32xf32> to vector<8x8xf32>
    %23 = vector.shape_cast %22 : vector<8x8xf32> to vector<1x8x8xf32>
    %24 = vector.extract_strided_slice %19 {offsets = [0, 16], sizes = [8, 8], strides = [1, 1]} : vector<8x32xf32> to vector<8x8xf32>
    %25 = vector.shape_cast %24 : vector<8x8xf32> to vector<1x8x8xf32>
    %26 = vector.extract_strided_slice %19 {offsets = [0, 24], sizes = [8, 8], strides = [1, 1]} : vector<8x32xf32> to vector<8x8xf32>
    %27 = vector.shape_cast %26 : vector<8x8xf32> to vector<1x8x8xf32>
    %28 = tpu.concatenate %21, %23, %25, %27 in 0 : vector<1x8x8xf32>, vector<1x8x8xf32>, vector<1x8x8xf32>, vector<1x8x8xf32> -> vector<4x8x8xf32>
    %29 = vector.extract_strided_slice %18 {offsets = [0, 32], sizes = [8, 32], strides = [1, 1]} : vector<8x96xf32> to vector<8x32xf32>
    %30 = vector.extract_strided_slice %29 {offsets = [0, 0], sizes = [8, 8], strides = [1, 1]} : vector<8x32xf32> to vector<8x8xf32>
    %31 = vector.shape_cast %30 : vector<8x8xf32> to vector<1x8x8xf32>
    %32 = vector.extract_strided_slice %29 {offsets = [0, 8], sizes = [8, 8], strides = [1, 1]} : vector<8x32xf32> to vector<8x8xf32>
    %33 = vector.shape_cast %32 : vector<8x8xf32> to vector<1x8x8xf32>
    %34 = vector.extract_strided_slice %29 {offsets = [0, 16], sizes = [8, 8], strides = [1, 1]} : vector<8x32xf32> to vector<8x8xf32>
    %35 = vector.shape_cast %34 : vector<8x8xf32> to vector<1x8x8xf32>
    %36 = vector.extract_strided_slice %29 {offsets = [0, 24], sizes = [8, 8], strides = [1, 1]} : vector<8x32xf32> to vector<8x8xf32>
    %37 = vector.shape_cast %36 : vector<8x8xf32> to vector<1x8x8xf32>
    %38 = tpu.concatenate %31, %33, %35, %37 in 0 : vector<1x8x8xf32>, vector<1x8x8xf32>, vector<1x8x8xf32>, vector<1x8x8xf32> -> vector<4x8x8xf32>
    %39 = vector.extract_strided_slice %18 {offsets = [0, 64], sizes = [8, 32], strides = [1, 1]} : vector<8x96xf32> to vector<8x32xf32>
    %40 = vector.extract_strided_slice %39 {offsets = [0, 0], sizes = [8, 8], strides = [1, 1]} : vector<8x32xf32> to vector<8x8xf32>
    %41 = vector.shape_cast %40 : vector<8x8xf32> to vector<1x8x8xf32>
    %42 = vector.extract_strided_slice %39 {offsets = [0, 8], sizes = [8, 8], strides = [1, 1]} : vector<8x32xf32> to vector<8x8xf32>
    %43 = vector.shape_cast %42 : vector<8x8xf32> to vector<1x8x8xf32>
    %44 = vector.extract_strided_slice %39 {offsets = [0, 16], sizes = [8, 8], strides = [1, 1]} : vector<8x32xf32> to vector<8x8xf32>
    %45 = vector.shape_cast %44 : vector<8x8xf32> to vector<1x8x8xf32>
    %46 = vector.extract_strided_slice %39 {offsets = [0, 24], sizes = [8, 8], strides = [1, 1]} : vector<8x32xf32> to vector<8x8xf32>
    %47 = vector.shape_cast %46 : vector<8x8xf32> to vector<1x8x8xf32>
    %48 = tpu.concatenate %41, %43, %45, %47 in 0 : vector<1x8x8xf32>, vector<1x8x8xf32>, vector<1x8x8xf32>, vector<1x8x8xf32> -> vector<4x8x8xf32>
    %49 = arith.truncf %48 : vector<4x8x8xf32> to vector<4x8x8xbf16>
    %c0_9 = arith.constant 0 : index
    %c0_10 = arith.constant 0 : index
    %50 = vector.load %arg5[%c0_9, %c0_10] : memref<8x4xf32, #tpu.memory_space<vmem>>, vector<8x4xf32>
    %c0_11 = arith.constant 0 : index
    %c0_12 = arith.constant 0 : index
    %51 = vector.load %arg6[%c0_11, %c0_12] : memref<8x4xf32, #tpu.memory_space<vmem>>, vector<8x4xf32>
    %52 = vector.extract_strided_slice %28 {offsets = [0, 0, 0], sizes = [4, 8, 4], strides = [1, 1, 1]} : vector<4x8x8xf32> to vector<4x8x4xf32>
    %53 = vector.extract_strided_slice %28 {offsets = [0, 0, 4], sizes = [4, 8, 4], strides = [1, 1, 1]} : vector<4x8x8xf32> to vector<4x8x4xf32>
    %54 = vector.shape_cast %50 : vector<8x4xf32> to vector<1x8x4xf32>
    %55 = vector.broadcast %54 : vector<1x8x4xf32> to vector<4x8x4xf32>
    %56 = arith.mulf %52, %55 : vector<4x8x4xf32>
    %57 = vector.shape_cast %51 : vector<8x4xf32> to vector<1x8x4xf32>
    %58 = vector.broadcast %57 : vector<1x8x4xf32> to vector<4x8x4xf32>
    %59 = arith.mulf %53, %58 : vector<4x8x4xf32>
    %60 = arith.subf %56, %59 : vector<4x8x4xf32>
    %61 = vector.shape_cast %50 : vector<8x4xf32> to vector<1x8x4xf32>
    %62 = vector.broadcast %61 : vector<1x8x4xf32> to vector<4x8x4xf32>
    %63 = arith.mulf %53, %62 : vector<4x8x4xf32>
    %64 = vector.shape_cast %51 : vector<8x4xf32> to vector<1x8x4xf32>
    %65 = vector.broadcast %64 : vector<1x8x4xf32> to vector<4x8x4xf32>
    %66 = arith.mulf %52, %65 : vector<4x8x4xf32>
    %67 = arith.addf %63, %66 : vector<4x8x4xf32>
    %68 = tpu.concatenate %60, %67 in 2 : vector<4x8x4xf32>, vector<4x8x4xf32> -> vector<4x8x8xf32>
    %69 = arith.truncf %68 : vector<4x8x8xf32> to vector<4x8x8xbf16>
    %70 = vector.extract_strided_slice %38 {offsets = [0, 0, 0], sizes = [4, 8, 4], strides = [1, 1, 1]} : vector<4x8x8xf32> to vector<4x8x4xf32>
    %71 = vector.extract_strided_slice %38 {offsets = [0, 0, 4], sizes = [4, 8, 4], strides = [1, 1, 1]} : vector<4x8x8xf32> to vector<4x8x4xf32>
    %72 = vector.shape_cast %50 : vector<8x4xf32> to vector<1x8x4xf32>
    %73 = vector.broadcast %72 : vector<1x8x4xf32> to vector<4x8x4xf32>
    %74 = arith.mulf %70, %73 : vector<4x8x4xf32>
    %75 = vector.shape_cast %51 : vector<8x4xf32> to vector<1x8x4xf32>
    %76 = vector.broadcast %75 : vector<1x8x4xf32> to vector<4x8x4xf32>
    %77 = arith.mulf %71, %76 : vector<4x8x4xf32>
    %78 = arith.subf %74, %77 : vector<4x8x4xf32>
    %79 = vector.shape_cast %50 : vector<8x4xf32> to vector<1x8x4xf32>
    %80 = vector.broadcast %79 : vector<1x8x4xf32> to vector<4x8x4xf32>
    %81 = arith.mulf %71, %80 : vector<4x8x4xf32>
    %82 = vector.shape_cast %51 : vector<8x4xf32> to vector<1x8x4xf32>
    %83 = vector.broadcast %82 : vector<1x8x4xf32> to vector<4x8x4xf32>
    %84 = arith.mulf %70, %83 : vector<4x8x4xf32>
    %85 = arith.addf %81, %84 : vector<4x8x4xf32>
    %86 = tpu.concatenate %78, %85 in 2 : vector<4x8x4xf32>, vector<4x8x4xf32> -> vector<4x8x8xf32>
    %87 = arith.truncf %86 : vector<4x8x8xf32> to vector<4x8x8xbf16>
    %88 = tpu.iota {dimensions = array<i32: 0>} : vector<8x8xi32>
    %89 = tpu.iota {dimensions = array<i32: 1>} : vector<8x8xi32>
    %90 = arith.cmpi sle, %89, %88 : vector<8x8xi32>
    "tpu.trace_start"() <{level = 10 : i32, message = "hqd,hkd->hqk"}> : () -> ()
    %cst_13 = arith.constant dense<0.000000e+00> : vector<4x8x8xf32>
    %91 = tpu.matmul %69, %87, %cst_13 {dimension_numbers = #tpu.dot_dimension_numbers<[2], [2], [1], [1], [0, 0, 0, 1, 1, 1], [0], [0]>} : vector<4x8x8xbf16>, vector<4x8x8xbf16>, vector<4x8x8xf32> -> vector<4x8x8xf32>
    %cst_14 = arith.constant -1.70141173E+38 : f32
    "tpu.trace_stop"() : () -> ()
    %92 = vector.shape_cast %90 : vector<8x8xi1> to vector<1x8x8xi1>
    %93 = vector.broadcast %92 : vector<1x8x8xi1> to vector<4x8x8xi1>
    %94 = vector.broadcast %cst_14 : f32 to vector<4x8x8xf32>
    %95 = arith.select %93, %91, %94 : vector<4x8x8xi1>, vector<4x8x8xf32>
    %cst_15 = arith.constant dense<0xFF800000> : vector<4x8xf32>
    %96 = vector.multi_reduction <maximumf>, %95, %cst_15 [2] : vector<4x8x8xf32> to vector<4x8xf32>
    %97 = vector.shape_cast %96 : vector<4x8xf32> to vector<4x8x1xf32>
    %98 = vector.broadcast %97 : vector<4x8x1xf32> to vector<4x8x8xf32>
    %99 = arith.subf %95, %98 : vector<4x8x8xf32>
    %100 = math.exp %99 : vector<4x8x8xf32>
    %cst_16 = arith.constant dense<0.000000e+00> : vector<4x8xf32>
    %101 = vector.multi_reduction <add>, %100, %cst_16 [2] : vector<4x8x8xf32> to vector<4x8xf32>
    %102 = vector.shape_cast %101 : vector<4x8xf32> to vector<4x8x1xf32>
    %103 = tpu.reciprocal %102 {approx = true} : vector<4x8x1xf32> -> vector<4x8x1xf32>
    %104 = vector.broadcast %103 : vector<4x8x1xf32> to vector<4x8x8xf32>
    %105 = arith.mulf %100, %104 : vector<4x8x8xf32>
    %106 = arith.truncf %105 : vector<4x8x8xf32> to vector<4x8x8xbf16>
    "tpu.trace_start"() <{level = 10 : i32, message = "hqk,hkd->hqd"}> : () -> ()
    %cst_17 = arith.constant dense<0.000000e+00> : vector<4x8x8xf32>
    %107 = tpu.matmul %106, %49, %cst_17 {dimension_numbers = #tpu.dot_dimension_numbers<[2], [1], [1], [2], [0, 0, 0, 1, 1, 2], [0], [0]>} : vector<4x8x8xbf16>, vector<4x8x8xbf16>, vector<4x8x8xf32> -> vector<4x8x8xf32>
    "tpu.trace_stop"() : () -> ()
    %108 = vector.extract_strided_slice %107 {offsets = [0, 0, 0], sizes = [1, 8, 8], strides = [1, 1, 1]} : vector<4x8x8xf32> to vector<1x8x8xf32>
    %109 = vector.shape_cast %108 : vector<1x8x8xf32> to vector<8x8xf32>
    %110 = vector.extract_strided_slice %107 {offsets = [1, 0, 0], sizes = [1, 8, 8], strides = [1, 1, 1]} : vector<4x8x8xf32> to vector<1x8x8xf32>
    %111 = vector.shape_cast %110 : vector<1x8x8xf32> to vector<8x8xf32>
    %112 = vector.extract_strided_slice %107 {offsets = [2, 0, 0], sizes = [1, 8, 8], strides = [1, 1, 1]} : vector<4x8x8xf32> to vector<1x8x8xf32>
    %113 = vector.shape_cast %112 : vector<1x8x8xf32> to vector<8x8xf32>
    %114 = vector.extract_strided_slice %107 {offsets = [3, 0, 0], sizes = [1, 8, 8], strides = [1, 1, 1]} : vector<4x8x8xf32> to vector<1x8x8xf32>
    %115 = vector.shape_cast %114 : vector<1x8x8xf32> to vector<8x8xf32>
    %116 = tpu.concatenate %109, %111, %113, %115 in 1 : vector<8x8xf32>, vector<8x8xf32>, vector<8x8xf32>, vector<8x8xf32> -> vector<8x32xf32>
    %117 = arith.truncf %116 : vector<8x32xf32> to vector<8x32xbf16>
    %c0_18 = arith.constant 0 : index
    %c0_19 = arith.constant 0 : index
    %118 = vector.load %arg4[%c0_18, %c0_19] : memref<32x32xbf16, #tpu.memory_space<vmem>>, vector<32x32xbf16>
    %cst_20 = arith.constant dense<0.000000e+00> : vector<8x32xf32>
    %119 = tpu.matmul %117, %118, %cst_20 {dimension_numbers = #tpu.dot_dimension_numbers<[1], [0], [0], [1], [0, 0, 1, 1], [], []>} : vector<8x32xbf16>, vector<32x32xbf16>, vector<8x32xf32> -> vector<8x32xf32>
    %120 = arith.addf %2, %119 : vector<8x32xf32>
    %121 = arith.truncf %120 : vector<8x32xf32> to vector<8x32xbf16>
    %c0_21 = arith.constant 0 : index
    %c0_22 = arith.constant 0 : index
    %c0_23 = arith.constant 0 : index
    %122 = vector.load %arg7[%c0_21, %c0_22, %c0_23] : memref<1x8x32xbf16, #tpu.memory_space<vmem>>, vector<1x8x32xbf16>
    %123 = vector.shape_cast %122 : vector<1x8x32xbf16> to vector<8x32xbf16>
    %124 = vector.shape_cast %121 : vector<8x32xbf16> to vector<1x8x32xbf16>
    tpu.vector_store %arg7[%c0_21, %c0_22, %c0_23], %124 {strides = array<i32>} : memref<1x8x32xbf16, #tpu.memory_space<vmem>>, vector<1x8x32xbf16>,
    return
  }
  func.func @transform_0(%arg0: i32) -> (i32, i32, i32) {
    %c0_i32 = arith.constant 0 : i32
    %c0_i32_0 = arith.constant 0 : i32
    %c0_i32_1 = arith.constant 0 : i32
    return %arg0, %c0_i32, %c0_i32_0 : i32, i32, i32
  }
  func.func @transform_1(%arg0: i32) -> (i32, i32) {
    %c0_i32 = arith.constant 0 : i32
    %c0_i32_0 = arith.constant 0 : i32
    %c0_i32_1 = arith.constant 0 : i32
    return %c0_i32, %c0_i32_0 : i32, i32
  }
  func.func @transform_2(%arg0: i32) -> (i32, i32) {
    %c0_i32 = arith.constant 0 : i32
    %c0_i32_0 = arith.constant 0 : i32
    %c0_i32_1 = arith.constant 0 : i32
    return %c0_i32, %c0_i32_0 : i32, i32
  }
  func.func @transform_3(%arg0: i32) -> (i32, i32) {
    %c0_i32 = arith.constant 0 : i32
    %c0_i32_0 = arith.constant 0 : i32
    %c0_i32_1 = arith.constant 0 : i32
    return %c0_i32, %c0_i32_0 : i32, i32
  }
  func.func @transform_4(%arg0: i32) -> (i32, i32) {
    %c0_i32 = arith.constant 0 : i32
    %c0_i32_0 = arith.constant 0 : i32
    %c0_i32_1 = arith.constant 0 : i32
    return %c0_i32, %c0_i32_0 : i32, i32
  }
  func.func @transform_5(%arg0: i32) -> (i32, i32) {
    %c0_i32 = arith.constant 0 : i32
    %c0_i32_0 = arith.constant 0 : i32
    %c0_i32_1 = arith.constant 0 : i32
    return %c0_i32, %c0_i32_0 : i32, i32
  }
  func.func @transform_6(%arg0: i32) -> (i32, i32, i32) {
    %c0_i32 = arith.constant 0 : i32
    %c0_i32_0 = arith.constant 0 : i32
    %c0_i32_1 = arith.constant 0 : i32
    return %arg0, %c0_i32, %c0_i32_0 : i32, i32, i32
  }
}

module attributes {stable_mosaic.version = 11 : i64} {
  func.func @_head_kernel(%arg0: i32, %arg1: i32, %arg2: memref<16x32xbf16, #tpu.memory_space<vmem>>, %arg3: memref<1x32xf32, #tpu.memory_space<vmem>>, %arg4: memref<32x64xbf16, #tpu.memory_space<vmem>>, %arg5: memref<16x64xf32, #tpu.memory_space<vmem>>) attributes {dimension_semantics = [#tpu.dimension_semantics<parallel>, #tpu.dimension_semantics<parallel>], iteration_bounds = array<i64: 1, 1>, scalar_prefetch = 0 : i64, scratch_operands = 0 : i64, tpu.core_type = #tpu.core_type<tc>, window_params = [{transform_indices = @transform_0, window_bounds = array<i64: 16, 32>}, {pipeline_mode = #tpu.pipeline_mode<synchronous>, transform_indices = @transform_1, window_bounds = array<i64: 1, 32>}, {transform_indices = @transform_2, window_bounds = array<i64: 32, 64>}, {transform_indices = @transform_3, window_bounds = array<i64: 16, 64>}]} {
    %c0 = arith.constant 0 : index
    %c0_0 = arith.constant 0 : index
    %0 = vector.load %arg2[%c0, %c0_0] : memref<16x32xbf16, #tpu.memory_space<vmem>>, vector<16x32xbf16>
    %1 = arith.extf %0 : vector<16x32xbf16> to vector<16x32xf32>
    %2 = arith.mulf %1, %1 : vector<16x32xf32>
    %cst = arith.constant dense<0.000000e+00> : vector<16xf32>
    %3 = vector.multi_reduction <add>, %2, %cst [1] : vector<16x32xf32> to vector<16xf32>
    %4 = vector.shape_cast %3 : vector<16xf32> to vector<16x1xf32>
    %cst_1 = arith.constant 3.200000e+01 : f32
    %5 = vector.broadcast %cst_1 : f32 to vector<16x1xf32>
    %6 = arith.divf %4, %5 : vector<16x1xf32>
    %cst_2 = arith.constant 9.99999974E-6 : f32
    %7 = vector.broadcast %cst_2 : f32 to vector<16x1xf32>
    %8 = arith.addf %6, %7 : vector<16x1xf32>
    %9 = math.rsqrt %8 : vector<16x1xf32>
    %10 = vector.broadcast %9 : vector<16x1xf32> to vector<16x32xf32>
    %11 = arith.mulf %1, %10 : vector<16x32xf32>
    %c0_3 = arith.constant 0 : index
    %c0_4 = arith.constant 0 : index
    %12 = vector.load %arg3[%c0_3, %c0_4] : memref<1x32xf32, #tpu.memory_space<vmem>>, vector<1x32xf32>
    %13 = vector.broadcast %12 : vector<1x32xf32> to vector<16x32xf32>
    %14 = arith.mulf %11, %13 : vector<16x32xf32>
    %15 = arith.truncf %14 : vector<16x32xf32> to vector<16x32xbf16>
    %c0_5 = arith.constant 0 : index
    %c0_6 = arith.constant 0 : index
    %16 = vector.load %arg4[%c0_5, %c0_6] : memref<32x64xbf16, #tpu.memory_space<vmem>>, vector<32x64xbf16>
    %cst_7 = arith.constant dense<0.000000e+00> : vector<16x64xf32>
    %17 = tpu.matmul %15, %16, %cst_7 {dimension_numbers = #tpu.dot_dimension_numbers<[1], [0], [0], [1], [0, 0, 1, 1], [], []>} : vector<16x32xbf16>, vector<32x64xbf16>, vector<16x64xf32> -> vector<16x64xf32>
    %c0_8 = arith.constant 0 : index
    %c0_9 = arith.constant 0 : index
    %18 = vector.load %arg5[%c0_8, %c0_9] : memref<16x64xf32, #tpu.memory_space<vmem>>, vector<16x64xf32>
    tpu.vector_store %arg5[%c0_8, %c0_9], %17 {strides = array<i32>} : memref<16x64xf32, #tpu.memory_space<vmem>>, vector<16x64xf32>,
    return
  }
  func.func @transform_0(%arg0: i32, %arg1: i32) -> (i32, i32) {
    %c0_i32 = arith.constant 0 : i32
    %c0_i32_0 = arith.constant 0 : i32
    return %arg0, %c0_i32 : i32, i32
  }
  func.func @transform_1(%arg0: i32, %arg1: i32) -> (i32, i32) {
    %c0_i32 = arith.constant 0 : i32
    %c0_i32_0 = arith.constant 0 : i32
    %c0_i32_1 = arith.constant 0 : i32
    return %c0_i32, %c0_i32_0 : i32, i32
  }
  func.func @transform_2(%arg0: i32, %arg1: i32) -> (i32, i32) {
    %c0_i32 = arith.constant 0 : i32
    %c0_i32_0 = arith.constant 0 : i32
    return %c0_i32, %arg1 : i32, i32
  }
  func.func @transform_3(%arg0: i32, %arg1: i32) -> (i32, i32) {
    %c0_i32 = arith.constant 0 : i32
    return %arg0, %arg1 : i32, i32
  }
}

</mosaic_0001>

<llo_original>
// kernel: transformer_forward.6
$region0: #{transformer_forward.6}
  #allocation0 [shape = 'u32[]', space=smem, size = 0x4, offset = 0x4, fixed_abs, tag = 'smem constant byte address 0x4 - core index']
  #allocation1 [shape = 'u32[72,128]{1,0:T(1,128)}', space=vmem, size = 0x9000, scoped, tag = 'internal scratch']
  #allocation2 [shape = 'bf16[16,32]{1,0:T(8,128)(2,1)}', space=vmem, size = 0x1000, scoped, tag = 'scratch operand']
  #allocation3 [shape = 'f32[16,32]{1,0:T(8,128)}', space=vmem, size = 0x2000, scoped, tag = 'scratch operand']
  %s0 = inlined_call_operand.vmem [shape: bf16[16,32], index: 0, kind: input, shape index: {}]
  %s1 = inlined_call_operand.vmem [shape: f32[1,32], index: 1, kind: input, shape index: {}]
  %s2 = inlined_call_operand.vmem [shape: bf16[32,64], index: 2, kind: input, shape index: {}]
  %s3 = inlined_call_operand.vmem [shape: bf16[32,64], index: 3, kind: input, shape index: {}]
  %s4 = inlined_call_operand.vmem [shape: bf16[64,32], index: 4, kind: input, shape index: {}]
  %s5 = inlined_call_operand.vmem [shape: bf16[16,32], index: 5, kind: output, shape index: {}]
  %s6 = sld [smem:[#allocation0]]
  $region38: #{transformer_forward.6} parent=0
    _
  %s8 = ssub.s32 1, %s6
  %s9 = scalar_select 0, %s8, %s6
  // Predicated region
  $region2: #{transformer_forward.6} parent=0 // pred_check
    _
  $region3: #{transformer_forward.6} parent=0 // pred_check_branch
    %11 = sbr.rel (0) target = $region5
  $region4: #{transformer_forward.6} parent=0 // pred_region
    _
  $region5: #{transformer_forward.6} parent=0 // pred_fallthru
    _
  // Predicated region
  $region6: #{transformer_forward.6} parent=0 // pred_check
    _
  $region7: #{transformer_forward.6} parent=0 // pred_check_branch
    %13 = sbr.rel (0) target = $region9
  $region8: #{transformer_forward.6} parent=0 // pred_region
    _
  $region9: #{transformer_forward.6} parent=0 // pred_fallthru
    _
  // Predicated region
  $region10: #{transformer_forward.6} parent=0 // pred_check
    _
  $region11: #{transformer_forward.6} parent=0 // pred_check_branch
    %15 = sbr.rel (0) target = $region13
  $region12: #{transformer_forward.6} parent=0 // pred_region
    _
  $region13: #{transformer_forward.6} parent=0 // pred_fallthru
    _
  // Predicated region
  $region14: #{transformer_forward.6} parent=0 // pred_check
    _
  $region15: #{transformer_forward.6} parent=0 // pred_check_branch
    %17 = sbr.rel (0) target = $region17
  $region16: #{transformer_forward.6} parent=0 // pred_region
    _
  $region17: #{transformer_forward.6} parent=0 // pred_fallthru
    _
  // Predicated region
  $region18: #{transformer_forward.6} parent=0 // pred_check
    _
  $region19: #{transformer_forward.6} parent=0 // pred_check_branch
    %19 = sbr.rel (0) target = $region21
  $region20: #{transformer_forward.6} parent=0 // pred_region
    _
  $region21: #{transformer_forward.6} parent=0 // pred_fallthru
    _
  %p21 = scmp.eq.s32.totalorder 0, 0
  // Predicated region
  $region22: #{transformer_forward.6} parent=0 // pred_check
    %p22 = pneg %p21
  $region23: #{transformer_forward.6} parent=0 // pred_check_branch
    %24 = sbr.rel (%p22) target = $region25
  $region24: #{transformer_forward.6} parent=0 // pred_region
    %v25 = vld [vmem:[%s0] sm:$0xf]
    %v26 = vld [vmem:[%s0 + $0x4] sm:$0xf]
    %v27 = vunpack.c.l.bf16 %v25
    %v28 = vunpack.c.l.bf16 %v26
    %v29 = vmul.f32 %v27, %v27
    %v30 = vmul.f32 %v28, %v28
    %vm31 = vcmask 261120
    %v32 = vsel %vm31, %v29, 0.0
    %33 = vadd.xlane.f32.xlu0 %v32
    %v34 = vpop.xlane.xlu0 %33
    %v35 = vsel %vm31, %v30, 0.0
    %36 = vadd.xlane.f32.xlu0 %v35
    %v37 = vpop.xlane.xlu0 %36
    %v38 = vrcp.pop 32.0
    %v39 = vmul.f32 32.0, %v38
    %v40 = vsub.f32 1.0, %v39
    %v41 = vmul.f32 %v38, %v40
    %v42 = vadd.f32 %v38, %v41
    %vm43 = vweird.f32 %v38
    %v44 = vsel %vm43, %v38, %v42
    %v45 = vmul.f32 %v34, %v44
    %v46 = vmul.f32 %v37, %v44
    %v47 = vadd.f32 %v45, 1e-05
    %v48 = vadd.f32 %v46, 1e-05
    %v49 = vrsqrt.pop %v47
    %v50 = vmul.f32 %v49, %v47
    %v51 = vmul.f32 %v50, %v49
    %v52 = vmul.f32 0.5, %v51
    %v53 = vsub.f32 1.5, %v52
    %v54 = vmul.f32 %v49, %v53
    %vm55 = vweird.f32 %v47
    %vm56 = vweird.f32 %v49
    %vm57 = vmor %vm55, %vm56
    %v58 = vsel %vm57, %v49, %v54
    %v59 = vrsqrt.pop %v48
    %v60 = vmul.f32 %v59, %v48
    %v61 = vmul.f32 %v60, %v59
    %v62 = vmul.f32 0.5, %v61
    %v63 = vsub.f32 1.5, %v62
    %v64 = vmul.f32 %v59, %v63
    %vm65 = vweird.f32 %v48
    %vm66 = vweird.f32 %v59
    %vm67 = vmor %vm65, %vm66
    %v68 = vsel %vm67, %v59, %v64
    %v69 = vmul.f32 %v27, %v58
    %v70 = vmul.f32 %v28, %v68
    %v71 = vld [vmem:[%s1] sm:$0x1]
    %v73 = vperm.slane %v71, 0
    %v75 = vmul.f32 %v69, %v73
    %v76 = vmul.f32 %v70, %v73
    %v77 = vpack.c.bf16 %v75, %v75
    %v78 = vpack.c.bf16 %v76, %v76
    %vm79 = vcmask 257024
    %80 = vst.msk [vmem:[#allocation2] sm:$0xf] %vm79, %v77
    %81 = vst.msk [vmem:[#allocation2 + $0x4] sm:$0xf] %vm79, %v78
    %82 = vst.msk [vmem:[#allocation3] sm:$0xff] %vm31, %v27
    %83 = vst.msk [vmem:[#allocation3 + $0x8] sm:$0xff] %vm31, %v28
  $region25: #{transformer_forward.6} parent=0 // pred_fallthru
    _
  %v84 = vld [vmem:[#allocation2] sm:$0xf]
  %v85 = vld [vmem:[#allocation2 + $0x4] sm:$0xf]
  %v86 = vld [vmem:[%s2] sm:$0xf]
  %v87 = vld [vmem:[%s2 + $0x4] sm:$0xf]
  %v88 = vld [vmem:[%s2 + $0x8] sm:$0xf]
  %v89 = vld [vmem:[%s2 + $0xc] sm:$0xf]
  %v92 = vunpack.c.l.b16 %v84
  %v93 = vunpack.c.l.b16 %v85
  %v94 = vpack.c.b16 %v93, %v92
  %v99 = vunpack.c.l.b16 %v86
  %v100 = vunpack.c.l.b16 %v87
  %v101 = vunpack.c.l.b16 %v88
  %v102 = vunpack.c.l.b16 %v89
  %v103 = vpack.c.b16 %v100, %v99
  %v104 = vpack.c.b16 %v102, %v101
  %vm107 = vcmask 261120
  %v109 = vsel %vm107, %v94, 0
  %111 = vmatpush.bf16.msra.mxu0 0
  %112 = vmatpush.bf16.msra.mxu0 0
  %113 = vmatpush.bf16.msra.mxu0 0
  %114 = vmatpush.bf16.msra.mxu0 0
  %115 = vmatpush.bf16.msra.mxu0 0
  %116 = vmatpush.bf16.msra.mxu0 0
  %117 = vmatpush.bf16.msra.mxu0 %v104
  %118 = vmatpush.bf16.msra.mxu0 %v103
  %119 = vmatmul.bf16.gmra.mxu0 %v109
  %v120 = vpop.f32.mrf.mxu0
  %v121 = vadd.f32 0.0, %v120
  %v122 = vpop.f32.mrf.mxu0
  %v123 = vadd.f32 0.0, %v122
  %124 = vdwg.mxu0
  %v125 = vld [vmem:[%s3] sm:$0xf]
  %v126 = vld [vmem:[%s3 + $0x4] sm:$0xf]
  %v127 = vld [vmem:[%s3 + $0x8] sm:$0xf]
  %v128 = vld [vmem:[%s3 + $0xc] sm:$0xf]
  %v133 = vunpack.c.l.b16 %v125
  %v134 = vunpack.c.l.b16 %v126
  %v135 = vunpack.c.l.b16 %v127
  %v136 = vunpack.c.l.b16 %v128
  %v137 = vpack.c.b16 %v134, %v133
  %v138 = vpack.c.b16 %v136, %v135
  %141 = vmatpush.bf16.msra.mxu0 0
  %142 = vmatpush.bf16.msra.mxu0 0
  %143 = vmatpush.bf16.msra.mxu0 0
  %144 = vmatpush.bf16.msra.mxu0 0
  %145 = vmatpush.bf16.msra.mxu0 0
  %146 = vmatpush.bf16.msra.mxu0 0
  %147 = vmatpush.bf16.msra.mxu0 %v138
  %148 = vmatpush.bf16.msra.mxu0 %v137
  %149 = vmatmul.bf16.gmra.mxu0 %v109
  %v150 = vpop.f32.mrf.mxu0
  %v151 = vadd.f32 0.0, %v150
  %v152 = vpop.f32.mrf.mxu0
  %v153 = vadd.f32 0.0, %v152
  %154 = vdwg.mxu0
  %v155 = vmul.f32 %v121, 0.5
  %v156 = vmul.f32 %v123, 0.5
  %v157 = vtanh.pop %v155
  %v158 = vtanh.pop %v156
  %v159 = vadd.f32 %v157, 1.0
  %v160 = vadd.f32 %v158, 1.0
  %v161 = vmul.f32 %v159, 0.5
  %v162 = vmul.f32 %v160, 0.5
  %v163 = vmul.f32 %v121, %v161
  %v164 = vmul.f32 %v123, %v162
  %v165 = vmul.f32 %v163, %v151
  %v166 = vmul.f32 %v164, %v153
  %v167 = vpack.c.bf16 %v166, %v165
  %v168 = vld [vmem:[#allocation3] sm:$0xff]
  %v169 = vld [vmem:[#allocation3 + $0x8] sm:$0xff]
  %v170 = vld [vmem:[%s4] sm:$0xf]
  %v171 = vld [vmem:[%s4 + $0x4] sm:$0xf]
  %v172 = vld [vmem:[%s4 + $0x8] sm:$0xf]
  %v173 = vld [vmem:[%s4 + $0xc] sm:$0xf]
  %v174 = vld [vmem:[%s4 + $0x10] sm:$0xf]
  %v175 = vld [vmem:[%s4 + $0x14] sm:$0xf]
  %v176 = vld [vmem:[%s4 + $0x18] sm:$0xf]
  %v177 = vld [vmem:[%s4 + $0x1c] sm:$0xf]
  %v186 = vunpack.c.l.b16 %v170
  %v187 = vunpack.c.l.b16 %v171
  %v188 = vunpack.c.l.b16 %v172
  %v189 = vunpack.c.l.b16 %v173
  %v190 = vunpack.c.l.b16 %v174
  %v191 = vunpack.c.l.b16 %v175
  %v192 = vunpack.c.l.b16 %v176
  %v193 = vunpack.c.l.b16 %v177
  %v194 = vpack.c.b16 %v187, %v186
  %v195 = vpack.c.b16 %v189, %v188
  %v196 = vpack.c.b16 %v191, %v190
  %v197 = vpack.c.b16 %v193, %v192
  %vm202 = vcmask 523264
  %v204 = vsel %vm202, %v167, 0
  %206 = vmatpush.bf16.msra.mxu0 0
  %207 = vmatpush.bf16.msra.mxu0 0
  %208 = vmatpush.bf16.msra.mxu0 0
  %209 = vmatpush.bf16.msra.mxu0 0
  %210 = vmatpush.bf16.msra.mxu0 %v197
  %211 = vmatpush.bf16.msra.mxu0 %v196
  %212 = vmatpush.bf16.msra.mxu0 %v195
  %213 = vmatpush.bf16.msra.mxu0 %v194
  %214 = vmatmul.bf16.gmra.mxu0 %v204
  %v215 = vpop.f32.mrf.mxu0
  %v216 = vadd.f32 0.0, %v215
  %v217 = vpop.f32.mrf.mxu0
  %v218 = vadd.f32 0.0, %v217
  %219 = vdwg.mxu0
  %v220 = vadd.f32 %v168, %v216
  %v221 = vadd.f32 %v169, %v218
  %222 = vst.msk [vmem:[#allocation3] sm:$0xff] %vm107, %v220
  %223 = vst.msk [vmem:[#allocation3 + $0x8] sm:$0xff] %vm107, %v221
  // Predicated region
  $region26: #{transformer_forward.6} parent=0 // pred_check
    %p224 = pneg %p21
  $region27: #{transformer_forward.6} parent=0 // pred_check_branch
    %226 = sbr.rel (%p224) target = $region29
  $region28: #{transformer_forward.6} parent=0 // pred_region
    %v227 = vld [vmem:[#allocation3] sm:$0xff]
    %v228 = vld [vmem:[#allocation3 + $0x8] sm:$0xff]
    %v229 = vpack.c.bf16 %v227, %v227
    %v230 = vpack.c.bf16 %v228, %v228
    %vm231 = vcmask 257024
    %232 = vst.msk [vmem:[%s5] sm:$0xf] %vm231, %v229
    %233 = vst.msk [vmem:[%s5 + $0x4] sm:$0xf] %vm231, %v230
  $region29: #{transformer_forward.6} parent=0 // pred_fallthru
    _
  // Predicated region
  $region30: #{transformer_forward.6} parent=0 // pred_check
    _
  $region31: #{transformer_forward.6} parent=0 // pred_check_branch
    %235 = sbr.rel (0) target = $region33
  $region32: #{transformer_forward.6} parent=0 // pred_region
    _
  $region33: #{transformer_forward.6} parent=0 // pred_fallthru
    _
  // Predicated region
  $region34: #{transformer_forward.6} parent=0 // pred_check
    _
  $region35: #{transformer_forward.6} parent=0 // pred_check_branch
    %237 = sbr.rel (0) target = $region37
  $region36: #{transformer_forward.6} parent=0 // pred_region
    _
  $region37: #{transformer_forward.6} parent=0 // pred_fallthru
    _

// kernel: transformer_forward.9
$region0: #{transformer_forward.9}
  #allocation0 [shape = 'u32[]', space=smem, size = 0x4, offset = 0x4, fixed_abs, tag = 'smem constant byte address 0x4 - core index']
  #allocation1 [shape = 'u32[72,128]{1,0:T(1,128)}', space=vmem, size = 0x9000, scoped, tag = 'internal scratch']
  %s0 = inlined_call_operand.vmem [shape: bf16[16,32], index: 0, kind: input, shape index: {}]
  %s1 = inlined_call_operand.vmem [shape: f32[1,32], index: 1, kind: input, shape index: {}]
  %s2 = inlined_call_operand.vmem [shape: bf16[32,64], index: 2, kind: input, shape index: {}]
  %s3 = inlined_call_operand.hbm [shape: f32[16,64], index: 3, kind: output, shape index: {}]
  %s4 = sld [smem:[#allocation0]]
  $region22: #{transformer_forward.9} parent=0
    _
  %s6 = ssub.s32 1, %s4
  %s7 = scalar_select 0, %s6, %s4
  $region1: #{transformer_forward.9} parent=0
    #allocation2 [shape = 'u8[8192]{0}', space=vmem, size = 0x2000, scoped, tag = 'output window, operand 0, single buffered']
    #allocation3 [shape = 's32[1]{0}', space=sflag, size = 0x4, scoped, tag = 'scoped memory for transformer_forward.9']
    %8 = vsyncpa [#allocation3], 0
    // Predicated region
    $region2: #{transformer_forward.9} parent=1 // pred_check
      _
    $region3: #{transformer_forward.9} parent=1 // pred_check_branch
      %10 = sbr.rel (0) target = $region5
    $region4: #{transformer_forward.9} parent=1 // pred_region
      _
    $region5: #{transformer_forward.9} parent=1 // pred_fallthru
      _
    // Predicated region
    $region6: #{transformer_forward.9} parent=1 // pred_check
      _
    $region7: #{transformer_forward.9} parent=1 // pred_check_branch
      %12 = sbr.rel (0) target = $region9
    $region8: #{transformer_forward.9} parent=1 // pred_region
      _
    $region9: #{transformer_forward.9} parent=1 // pred_fallthru
      _
    // Predicated region
    $region10: #{transformer_forward.9} parent=1 // pred_check
      _
    $region11: #{transformer_forward.9} parent=1 // pred_check_branch
      %14 = sbr.rel (0) target = $region13
    $region12: #{transformer_forward.9} parent=1 // pred_region
      _
    $region13: #{transformer_forward.9} parent=1 // pred_fallthru
      _
    %v16 = vld [vmem:[%s0] sm:$0xf]
    %v17 = vld [vmem:[%s0 + $0x4] sm:$0xf]
    %v18 = vunpack.c.l.bf16 %v16
    %v19 = vunpack.c.l.bf16 %v17
    %v20 = vmul.f32 %v18, %v18
    %v21 = vmul.f32 %v19, %v19
    %vm22 = vcmask 261120
    %v23 = vsel %vm22, %v20, 0.0
    %24 = vadd.xlane.f32.xlu0 %v23
    %v25 = vpop.xlane.xlu0 %24
    %v26 = vsel %vm22, %v21, 0.0
    %27 = vadd.xlane.f32.xlu0 %v26
    %v28 = vpop.xlane.xlu0 %27
    %v29 = vrcp.pop 32.0
    %v30 = vmul.f32 32.0, %v29
    %v31 = vsub.f32 1.0, %v30
    %v32 = vmul.f32 %v29, %v31
    %v33 = vadd.f32 %v29, %v32
    %vm34 = vweird.f32 %v29
    %v35 = vsel %vm34, %v29, %v33
    %v36 = vmul.f32 %v25, %v35
    %v37 = vmul.f32 %v28, %v35
    %v38 = vadd.f32 %v36, 1e-05
    %v39 = vadd.f32 %v37, 1e-05
    %v40 = vrsqrt.pop %v38
    %v41 = vmul.f32 %v40, %v38
    %v42 = vmul.f32 %v41, %v40
    %v43 = vmul.f32 0.5, %v42
    %v44 = vsub.f32 1.5, %v43
    %v45 = vmul.f32 %v40, %v44
    %vm46 = vweird.f32 %v38
    %vm47 = vweird.f32 %v40
    %vm48 = vmor %vm46, %vm47
    %v49 = vsel %vm48, %v40, %v45
    %v50 = vrsqrt.pop %v39
    %v51 = vmul.f32 %v50, %v39
    %v52 = vmul.f32 %v51, %v50
    %v53 = vmul.f32 0.5, %v52
    %v54 = vsub.f32 1.5, %v53
    %v55 = vmul.f32 %v50, %v54
    %vm56 = vweird.f32 %v39
    %vm57 = vweird.f32 %v50
    %vm58 = vmor %vm56, %vm57
    %v59 = vsel %vm58, %v50, %v55
    %v60 = vmul.f32 %v18, %v49
    %v61 = vmul.f32 %v19, %v59
    %v62 = vld [vmem:[%s1] sm:$0x1]
    %v64 = vperm.slane %v62, 0
    %v66 = vmul.f32 %v60, %v64
    %v67 = vmul.f32 %v61, %v64
    %v68 = vpack.c.bf16 %v67, %v66
    %v69 = vld [vmem:[%s2] sm:$0xf]
    %v70 = vld [vmem:[%s2 + $0x4] sm:$0xf]
    %v71 = vld [vmem:[%s2 + $0x8] sm:$0xf]
    %v72 = vld [vmem:[%s2 + $0xc] sm:$0xf]
    %v77 = vunpack.c.l.b16 %v69
    %v78 = vunpack.c.l.b16 %v70
    %v79 = vunpack.c.l.b16 %v71
    %v80 = vunpack.c.l.b16 %v72
    %v81 = vpack.c.b16 %v78, %v77
    %v82 = vpack.c.b16 %v80, %v79
    %v86 = vsel %vm22, %v68, 0
    %88 = vmatpush.bf16.msra.mxu0 0
    %89 = vmatpush.bf16.msra.mxu0 0
    %90 = vmatpush.bf16.msra.mxu0 0
    %91 = vmatpush.bf16.msra.mxu0 0
    %92 = vmatpush.bf16.msra.mxu0 0
    %93 = vmatpush.bf16.msra.mxu0 0
    %94 = vmatpush.bf16.msra.mxu0 %v82
    %95 = vmatpush.bf16.msra.mxu0 %v81
    %96 = vmatmul.bf16.gmra.mxu0 %v86
    %v97 = vpop.f32.mrf.mxu0
    %v98 = vadd.f32 0.0, %v97
    %v99 = vpop.f32.mrf.mxu0
    %v100 = vadd.f32 0.0, %v99
    %101 = vdwg.mxu0
    %vm102 = vcmask 523264
    %103 = vst.msk [vmem:[#allocation2] sm:$0xff] %vm102, %v98
    %104 = vst.msk [vmem:[#allocation2 + $0x8] sm:$0xff] %vm102, %v100
    // Predicated region
    $region14: #{transformer_forward.9} parent=1 // pred_check
      _
    $region15: #{transformer_forward.9} parent=1 // pred_check_branch
      %106 = sbr.rel (0) target = $region17
    $region16: #{transformer_forward.9} parent=1 // pred_region
      %108 = vsyncadd [#allocation3], 0
      %s109 = sshll.u32 [#allocation2], 4
      %s110 = int_to_ptr.vmem [resolvable:$true] %s109
      %s111 = sshll.u32 %s3, 4
      %s112 = int_to_ptr.hbm [resolvable:$true] %s111
      %117 = dma.vmem_to_hbm [thread:$0]  %s110, 256, %s112, [#allocation3], 128, 128, 8
    $region17: #{transformer_forward.9} parent=1 // pred_fallthru
      _
    // Predicated region
    $region18: #{transformer_forward.9} parent=1 // pred_check
      _
    $region19: #{transformer_forward.9} parent=1 // pred_check_branch
      %119 = sbr.rel (0) target = $region21
    $region20: #{transformer_forward.9} parent=1 // pred_region
      %121 = dma.done [#allocation3], 256
    $region21: #{transformer_forward.9} parent=1 // pred_fallthru
      _
    %122 = vsyncpa [#allocation3], 1

// kernel: transformer_forward.5
$region0: #{transformer_forward.5}
  #allocation0 [shape = 'u32[]', space=smem, size = 0x4, offset = 0x4, fixed_abs, tag = 'smem constant byte address 0x4 - core index']
  #allocation1 [shape = 'u32[72,128]{1,0:T(1,128)}', space=vmem, size = 0x9000, scoped, tag = 'internal scratch']
  %s0 = inlined_call_operand.vmem [shape: bf16[2,8,32], index: 0, kind: input, shape index: {}]
  %s1 = inlined_call_operand.vmem [shape: f32[1,32], index: 1, kind: input, shape index: {}]
  %s2 = inlined_call_operand.vmem [shape: bf16[32,96], index: 2, kind: input, shape index: {}]
  %s3 = inlined_call_operand.vmem [shape: bf16[32,32], index: 3, kind: input, shape index: {}]
  %s4 = inlined_call_operand.vmem [shape: f32[8,4], index: 4, kind: input, shape index: {}]
  %s5 = inlined_call_operand.vmem [shape: f32[8,4], index: 5, kind: input, shape index: {}]
  %s6 = inlined_call_operand.vmem [shape: bf16[2,8,32], index: 6, kind: output, shape index: {}]
  %s7 = sld [smem:[#allocation0]]
  $region57: #{transformer_forward.5} parent=0
    _
  %s9 = ssub.s32 1, %s7
  %s10 = scalar_select 0, %s9, %s7
  loop: start=0, step=1, limit=4
  $region2: #{transformer_forward.5} parent=0 // loop_pre_header
    _
  $region3: #{transformer_forward.5} parent=0 // loop_header
    %s12 = sphi 0, %s16
    %p13 = scmp.ge.s32.totalorder %s12, 4
    %s22 = sphi 0, %s24
    %s25 = sphi 0, %s22
    %s26 = sphi 0, %s25
    %s42 = sphi 0, %s26
    %s46 = sphi 0, %s46
    %s48 = sphi 0, %s46
    %s49 = sphi 0, %s48
    %s63 = sphi 0, %s49
    %s67 = sphi 0, %s67
    %s69 = sphi 0, %s67
    %s70 = sphi 0, %s69
    %s84 = sphi 0, %s70
    %s88 = sphi 0, %s88
    %s90 = sphi 0, %s88
    %s91 = sphi 0, %s90
    %s105 = sphi 0, %s91
    %s109 = sphi 0, %s109
    %s111 = sphi 0, %s109
    %s112 = sphi 0, %s111
    %s126 = sphi 0, %s112
    %s130 = sphi 0, %s130
    %s132 = sphi 0, %s130
    %s133 = sphi 0, %s132
    %s147 = sphi 0, %s133
    %s153 = sphi 0, %s155
    %s156 = sphi 0, %s153
    %s157 = sphi 0, %s156
    %s173 = sphi 0, %s157
  $region4: #{transformer_forward.5} parent=0 // loop_header_branch
    %15 = sbr.rel (%p13) target = $region8
  $region5: #{transformer_forward.5} parent=0 // loop_body
    %s17 = ssub.s32 %s12, 1
    %s18 = ssub.s32 %s12, 2
    %s19 = sadd.s32 %s12, 1
    %s20 = ssub.s32 %s12, %s19
    %p21 = scmp.eq.s32.totalorder %s20, 0
    %s23 = sadd.s32 %s22, 1
    %s24 = scalar_select %p21, %s22, %s23
    %p27 = pneg %p21
    %p28 = scmp.eq.s32.totalorder %s12, 1
    %p29 = por %p27, %p28
    %p30 = scmp.ne.s32.totalorder %s22, %s25
    %p31 = scmp.eq.s32.totalorder %s12, 0
    %p32 = por %p30, %p31
    %p33 = scmp.ne.s32.totalorder %s22, %s25
    %p34 = scmp.eq.s32.totalorder %s17, 1
    %p35 = por %p33, %p34
    %p36 = scmp.ne.s32.totalorder %s25, %s26
    %p37 = scmp.eq.s32.totalorder %s17, 0
    %p38 = por %p36, %p37
    %p39 = scmp.ne.s32.totalorder %s25, %s26
    %p40 = scmp.eq.s32.totalorder %s18, 1
    %p41 = por %p39, %p40
    %p43 = scmp.ne.s32.totalorder %s26, %s42
    %p44 = scmp.eq.s32.totalorder %s18, 0
    %p45 = por %p43, %p44
    %s47 = sadd.s32 %s46, 1
    %p50 = scmp.eq.s32.totalorder %s12, 1
    %p51 = scmp.ne.s32.totalorder %s46, %s48
    %p52 = scmp.eq.s32.totalorder %s12, 0
    %p53 = por %p51, %p52
    %p54 = scmp.ne.s32.totalorder %s46, %s48
    %p55 = scmp.eq.s32.totalorder %s17, 1
    %p56 = por %p54, %p55
    %p57 = scmp.ne.s32.totalorder %s48, %s49
    %p58 = scmp.eq.s32.totalorder %s17, 0
    %p59 = por %p57, %p58
    %p60 = scmp.ne.s32.totalorder %s48, %s49
    %p61 = scmp.eq.s32.totalorder %s18, 1
    %p62 = por %p60, %p61
    %p64 = scmp.ne.s32.totalorder %s49, %s63
    %p65 = scmp.eq.s32.totalorder %s18, 0
    %p66 = por %p64, %p65
    %s68 = sadd.s32 %s67, 1
    %p71 = scmp.eq.s32.totalorder %s12, 1
    %p72 = scmp.ne.s32.totalorder %s67, %s69
    %p73 = scmp.eq.s32.totalorder %s12, 0
    %p74 = por %p72, %p73
    %p75 = scmp.ne.s32.totalorder %s67, %s69
    %p76 = scmp.eq.s32.totalorder %s17, 1
    %p77 = por %p75, %p76
    %p78 = scmp.ne.s32.totalorder %s69, %s70
    %p79 = scmp.eq.s32.totalorder %s17, 0
    %p80 = por %p78, %p79
    %p81 = scmp.ne.s32.totalorder %s69, %s70
    %p82 = scmp.eq.s32.totalorder %s18, 1
    %p83 = por %p81, %p82
    %p85 = scmp.ne.s32.totalorder %s70, %s84
    %p86 = scmp.eq.s32.totalorder %s18, 0
    %p87 = por %p85, %p86
    %s89 = sadd.s32 %s88, 1
    %p92 = scmp.eq.s32.totalorder %s12, 1
    %p93 = scmp.ne.s32.totalorder %s88, %s90
    %p94 = scmp.eq.s32.totalorder %s12, 0
    %p95 = por %p93, %p94
    %p96 = scmp.ne.s32.totalorder %s88, %s90
    %p97 = scmp.eq.s32.totalorder %s17, 1
    %p98 = por %p96, %p97
    %p99 = scmp.ne.s32.totalorder %s90, %s91
    %p100 = scmp.eq.s32.totalorder %s17, 0
    %p101 = por %p99, %p100
    %p102 = scmp.ne.s32.totalorder %s90, %s91
    %p103 = scmp.eq.s32.totalorder %s18, 1
    %p104 = por %p102, %p103
    %p106 = scmp.ne.s32.totalorder %s91, %s105
    %p107 = scmp.eq.s32.totalorder %s18, 0
    %p108 = por %p106, %p107
    %s110 = sadd.s32 %s109, 1
    %p113 = scmp.eq.s32.totalorder %s12, 1
    %p114 = scmp.ne.s32.totalorder %s109, %s111
    %p115 = scmp.eq.s32.totalorder %s12, 0
    %p116 = por %p114, %p115
    %p117 = scmp.ne.s32.totalorder %s109, %s111
    %p118 = scmp.eq.s32.totalorder %s17, 1
    %p119 = por %p117, %p118
    %p120 = scmp.ne.s32.totalorder %s111, %s112
    %p121 = scmp.eq.s32.totalorder %s17, 0
    %p122 = por %p120, %p121
    %p123 = scmp.ne.s32.totalorder %s111, %s112
    %p124 = scmp.eq.s32.totalorder %s18, 1
    %p125 = por %p123, %p124
    %p127 = scmp.ne.s32.totalorder %s112, %s126
    %p128 = scmp.eq.s32.totalorder %s18, 0
    %p129 = por %p127, %p128
    %s131 = sadd.s32 %s130, 1
    %p134 = scmp.eq.s32.totalorder %s12, 1
    %p135 = scmp.ne.s32.totalorder %s130, %s132
    %p136 = scmp.eq.s32.totalorder %s12, 0
    %p137 = por %p135, %p136
    %p138 = scmp.ne.s32.totalorder %s130, %s132
    %p139 = scmp.eq.s32.totalorder %s17, 1
    %p140 = por %p138, %p139
    %p141 = scmp.ne.s32.totalorder %s132, %s133
    %p142 = scmp.eq.s32.totalorder %s17, 0
    %p143 = por %p141, %p142
    %p144 = scmp.ne.s32.totalorder %s132, %s133
    %p145 = scmp.eq.s32.totalorder %s18, 1
    %p146 = por %p144, %p145
    %p148 = scmp.ne.s32.totalorder %s133, %s147
    %p149 = scmp.eq.s32.totalorder %s18, 0
    %p150 = por %p148, %p149
    %s151 = ssub.s32 %s12, %s19
    %p152 = scmp.eq.s32.totalorder %s151, 0
    %s154 = sadd.s32 %s153, 1
    %s155 = scalar_select %p152, %s153, %s154
    %p158 = pneg %p152
    %p159 = scmp.eq.s32.totalorder %s12, 1
    %p160 = por %p158, %p159
    %p161 = scmp.ne.s32.totalorder %s153, %s156
    %p162 = scmp.eq.s32.totalorder %s12, 0
    %p163 = por %p161, %p162
    %p164 = scmp.ne.s32.totalorder %s153, %s156
    %p165 = scmp.eq.s32.totalorder %s17, 1
    %p166 = por %p164, %p165
    %p167 = scmp.ne.s32.totalorder %s156, %s157
    %p168 = scmp.eq.s32.totalorder %s17, 0
    %p169 = por %p167, %p168
    %p170 = scmp.ne.s32.totalorder %s156, %s157
    %p171 = scmp.eq.s32.totalorder %s18, 1
    %p172 = por %p170, %p171
    %p174 = scmp.ne.s32.totalorder %s157, %s173
    %p175 = scmp.eq.s32.totalorder %s18, 0
    %p176 = por %p174, %p175
    %p177 = scmp.le.s32.totalorder 1, %s12
    %p178 = scmp.lt.s32.totalorder %s12, 3
    %p179 = pnand %p177, %p178
    %p180 = pneg %p179
    // Predicated region
    $region9: #{transformer_forward.5} parent=5 // pred_check
      _
    $region10: #{transformer_forward.5} parent=5 // pred_check_branch
      %182 = sbr.rel (%p179) target = $region12
    $region11: #{transformer_forward.5} parent=5 // pred_region
      %s183 = ssub.s32 %s12, 1
      // Predicated region
      $region13: #{transformer_forward.5} parent=11 // pred_check
        %p184 = pneg %p59
      $region14: #{transformer_forward.5} parent=11 // pred_check_branch
        %186 = sbr.rel (%p184) target = $region16
      $region15: #{transformer_forward.5} parent=11 // pred_region
        _
      $region16: #{transformer_forward.5} parent=11 // pred_fallthru
        _
      // Predicated region
      $region17: #{transformer_forward.5} parent=11 // pred_check
        %p187 = pneg %p80
      $region18: #{transformer_forward.5} parent=11 // pred_check_branch
        %189 = sbr.rel (%p187) target = $region20
      $region19: #{transformer_forward.5} parent=11 // pred_region
        _
      $region20: #{transformer_forward.5} parent=11 // pred_fallthru
        _
      // Predicated region
      $region21: #{transformer_forward.5} parent=11 // pred_check
        %p190 = pneg %p101
      $region22: #{transformer_forward.5} parent=11 // pred_check_branch
        %192 = sbr.rel (%p190) target = $region24
      $region23: #{transformer_forward.5} parent=11 // pred_region
        _
      $region24: #{transformer_forward.5} parent=11 // pred_fallthru
        _
      // Predicated region
      $region25: #{transformer_forward.5} parent=11 // pred_check
        %p193 = pneg %p122
      $region26: #{transformer_forward.5} parent=11 // pred_check_branch
        %195 = sbr.rel (%p193) target = $region28
      $region27: #{transformer_forward.5} parent=11 // pred_region
        _
      $region28: #{transformer_forward.5} parent=11 // pred_fallthru
        _
      // Predicated region
      $region29: #{transformer_forward.5} parent=11 // pred_check
        %p196 = pneg %p143
      $region30: #{transformer_forward.5} parent=11 // pred_check_branch
        %198 = sbr.rel (%p196) target = $region32
      $region31: #{transformer_forward.5} parent=11 // pred_region
        _
      $region32: #{transformer_forward.5} parent=11 // pred_fallthru
        _
    $region12: #{transformer_forward.5} parent=5 // pred_fallthru
      _
    %p199 = scmp.lt.s32.totalorder %s12, 2
    // Predicated region
    $region33: #{transformer_forward.5} parent=5 // pred_check
      %p200 = pneg %p199
    $region34: #{transformer_forward.5} parent=5 // pred_check_branch
      %202 = sbr.rel (%p200) target = $region36
    $region35: #{transformer_forward.5} parent=5 // pred_region
      // Predicated region
      $region37: #{transformer_forward.5} parent=35 // pred_check
        %p203 = pneg %p32
      $region38: #{transformer_forward.5} parent=35 // pred_check_branch
        %205 = sbr.rel (%p203) target = $region40
      $region39: #{transformer_forward.5} parent=35 // pred_region
        %p206 = scmp.lt.s32.totalorder %s12, 1
        %s207 = scalar_select %p206, %s12, 1
        %s208 = smul.addr %s207, 4
        %s209 = scalar_lea.vmem %s0, %s208
      $region40: #{transformer_forward.5} parent=35 // pred_fallthru
        _
    $region36: #{transformer_forward.5} parent=5 // pred_fallthru
      _
    %p210 = scmp.le.s32.totalorder 1, %s12
    %p211 = scmp.lt.s32.totalorder %s12, 3
    %p212 = pnand %p210, %p211
    %p213 = pneg %p212
    // Predicated region
    $region41: #{transformer_forward.5} parent=5 // pred_check
      _
    $region42: #{transformer_forward.5} parent=5 // pred_check_branch
      %215 = sbr.rel (%p212) target = $region44
    $region43: #{transformer_forward.5} parent=5 // pred_region
      %s216 = ssub.s32 %s12, 1
      %p217 = scmp.lt.s32.totalorder %s17, 1
      %s218 = scalar_select %p217, %s17, 1
      %s219 = smul.addr %s218, 4
      %s220 = scalar_lea.vmem %s0, %s219
      %p221 = pneg %p38
      %p222 = pneg %p35
      %p223 = pneg %p59
      %p224 = pneg %p56
      %p225 = pneg %p80
      %p226 = pneg %p77
      %p227 = pneg %p101
      %p228 = pneg %p98
      %p229 = pneg %p122
      %p230 = pneg %p119
      %p231 = pneg %p143
      %p232 = pneg %p140
      %p233 = pneg %p169
      %p234 = pneg %p166
      %p235 = scmp.lt.s32.totalorder %s17, 1
      %s236 = scalar_select %p235, %s17, 1
      %s237 = smul.addr %s236, 4
      %s238 = scalar_lea.vmem %s6, %s237
      %p239 = scmp.lt.s32.totalorder %s17, 1
      %s240 = scalar_select %p239, %s17, 1
      %s241 = smul.addr %s240, 4
      %s242 = scalar_lea.vmem %s0, %s241
      %p243 = scmp.lt.s32.totalorder %s17, 1
      %s244 = scalar_select %p243, %s17, 1
      %s245 = smul.addr %s244, 4
      %s246 = scalar_lea.vmem %s6, %s245
      %v248 = vld [vmem:[%s242] sm:$0xf]
      %v249 = vunpack.c.l.bf16 %v248
      %v250 = vmul.f32 %v249, %v249
      %vm251 = vcmask 261120
      %v252 = vsel %vm251, %v250, 0.0
      %253 = vadd.xlane.f32.xlu0 %v252
      %v254 = vpop.xlane.xlu0 %253
      %v255 = vrcp.pop 32.0
      %v256 = vmul.f32 32.0, %v255
      %v257 = vsub.f32 1.0, %v256
      %v258 = vmul.f32 %v255, %v257
      %v259 = vadd.f32 %v255, %v258
      %vm260 = vweird.f32 %v255
      %v261 = vsel %vm260, %v255, %v259
      %v262 = vmul.f32 %v254, %v261
      %v263 = vadd.f32 %v262, 1e-05
      %v264 = vrsqrt.pop %v263
      %v265 = vmul.f32 %v264, %v263
      %v266 = vmul.f32 %v265, %v264
      %v267 = vmul.f32 0.5, %v266
      %v268 = vsub.f32 1.5, %v267
      %v269 = vmul.f32 %v264, %v268
      %vm270 = vweird.f32 %v263
      %vm271 = vweird.f32 %v264
      %vm272 = vmor %vm270, %vm271
      %v273 = vsel %vm272, %v264, %v269
      %v274 = vmul.f32 %v249, %v273
      %v275 = vld [vmem:[%s1] sm:$0x1]
      %v277 = vperm.slane %v275, 0
      %v279 = vmul.f32 %v274, %v277
      %v280 = vpack.c.bf16 %v279, %v279
      %v281 = vld [vmem:[%s2] sm:$0xf]
      %v282 = vld [vmem:[%s2 + $0x4] sm:$0xf]
      %v283 = vld [vmem:[%s2 + $0x8] sm:$0xf]
      %v284 = vld [vmem:[%s2 + $0xc] sm:$0xf]
      %v289 = vunpack.c.l.b16 %v281
      %v290 = vunpack.c.l.b16 %v282
      %v291 = vunpack.c.l.b16 %v283
      %v292 = vunpack.c.l.b16 %v284
      %v293 = vpack.c.b16 %v290, %v289
      %v294 = vpack.c.b16 %v292, %v291
      %v298 = vsel %vm251, %v280, 0
      %300 = vmatpush.bf16.msra.mxu0 0
      %301 = vmatpush.bf16.msra.mxu0 0
      %302 = vmatpush.bf16.msra.mxu0 0
      %303 = vmatpush.bf16.msra.mxu0 0
      %304 = vmatpush.bf16.msra.mxu0 0
      %305 = vmatpush.bf16.msra.mxu0 0
      %306 = vmatpush.bf16.msra.mxu0 %v294
      %307 = vmatpush.bf16.msra.mxu0 %v293
      %308 = vmatmul.bf16.gmra.mxu0 %v298
      %v309 = vpop.f32.mrf.mxu0
      %v310 = vadd.f32 0.0, %v309
      %v311 = vpop.f32.mrf.mxu0
      %312 = vdwg.mxu0
      %314 = vrot.lane.b32.xlu0 %v310, 120
      %v315 = vpop.permute.xlu0 %314
      %317 = vrot.lane.b32.xlu0 %v310, 112
      %v318 = vpop.permute.xlu0 %317
      %320 = vrot.lane.b32.xlu0 %v310, 104
      %v321 = vpop.permute.xlu0 %320
      %v323 = vpack.c.bf16 %v310, %v310
      %v324 = vpack.c.bf16 %v315, %v315
      %v325 = vpack.c.bf16 %v318, %v318
      %v326 = vpack.c.bf16 %v321, %v321
      %v327 = vld [vmem:[%s4] sm:$0xff]
      %v328 = vld [vmem:[%s5] sm:$0xff]
      %v329 = vmul.f32 %v310, %v327
      %v330 = vmul.f32 %v315, %v327
      %v331 = vmul.f32 %v318, %v327
      %v332 = vmul.f32 %v321, %v327
      %334 = vrot.lane.b32.xlu0 %v328, 4
      %v335 = vpop.permute.xlu0 %334
      %v337 = vmul.f32 %v310, %v335
      %v338 = vmul.f32 %v315, %v335
      %v339 = vmul.f32 %v318, %v335
      %v340 = vmul.f32 %v321, %v335
      %345 = vrot.lane.b32.xlu0 %v337, 124
      %v346 = vpop.permute.xlu0 %345
      %347 = vrot.lane.b32.xlu0 %v338, 124
      %v348 = vpop.permute.xlu0 %347
      %349 = vrot.lane.b32.xlu0 %v339, 124
      %v350 = vpop.permute.xlu0 %349
      %351 = vrot.lane.b32.xlu0 %v340, 124
      %v352 = vpop.permute.xlu0 %351
      %v357 = vsub.f32 %v329, %v346
      %v358 = vsub.f32 %v330, %v348
      %v359 = vsub.f32 %v331, %v350
      %v360 = vsub.f32 %v332, %v352
      %362 = vrot.lane.b32.xlu0 %v327, 4
      %v363 = vpop.permute.xlu0 %362
      %v365 = vmul.f32 %v310, %v363
      %v366 = vmul.f32 %v315, %v363
      %v367 = vmul.f32 %v318, %v363
      %v368 = vmul.f32 %v321, %v363
      %v369 = vmul.f32 %v310, %v328
      %v370 = vmul.f32 %v315, %v328
      %v371 = vmul.f32 %v318, %v328
      %v372 = vmul.f32 %v321, %v328
      %377 = vrot.lane.b32.xlu0 %v369, 4
      %v378 = vpop.permute.xlu0 %377
      %379 = vrot.lane.b32.xlu0 %v370, 4
      %v380 = vpop.permute.xlu0 %379
      %381 = vrot.lane.b32.xlu0 %v371, 4
      %v382 = vpop.permute.xlu0 %381
      %383 = vrot.lane.b32.xlu0 %v372, 4
      %v384 = vpop.permute.xlu0 %383
      %v389 = vadd.f32 %v365, %v378
      %v390 = vadd.f32 %v366, %v380
      %v391 = vadd.f32 %v367, %v382
      %v392 = vadd.f32 %v368, %v384
      %vm393 = vcmask 31744
      %v394 = vsel %vm393, %v357, %v389
      %v395 = vsel %vm393, %v358, %v390
      %v396 = vsel %vm393, %v359, %v391
      %v397 = vsel %vm393, %v360, %v392
      %v398 = vpack.c.bf16 %v394, %v394
      %v399 = vpack.c.bf16 %v395, %v395
      %v400 = vpack.c.bf16 %v396, %v396
      %v401 = vpack.c.bf16 %v397, %v397
      %402 = vrot.lane.b32.xlu0 %v327, 32
      %v403 = vpop.permute.xlu0 %402
      %v405 = vmul.f32 %v310, %v403
      %v406 = vmul.f32 %v315, %v403
      %v407 = vmul.f32 %v318, %v403
      %v408 = vmul.f32 %v321, %v403
      %409 = vrot.lane.b32.xlu0 %v328, 36
      %v410 = vpop.permute.xlu0 %409
      %v412 = vmul.f32 %v310, %v410
      %v413 = vmul.f32 %v315, %v410
      %v414 = vmul.f32 %v318, %v410
      %v415 = vmul.f32 %v321, %v410
      %420 = vrot.lane.b32.xlu0 %v412, 124
      %v421 = vpop.permute.xlu0 %420
      %422 = vrot.lane.b32.xlu0 %v413, 124
      %v423 = vpop.permute.xlu0 %422
      %424 = vrot.lane.b32.xlu0 %v414, 124
      %v425 = vpop.permute.xlu0 %424
      %426 = vrot.lane.b32.xlu0 %v415, 124
      %v427 = vpop.permute.xlu0 %426
      %v432 = vsub.f32 %v405, %v421
      %v433 = vsub.f32 %v406, %v423
      %v434 = vsub.f32 %v407, %v425
      %v435 = vsub.f32 %v408, %v427
      %436 = vrot.lane.b32.xlu0 %v327, 36
      %v437 = vpop.permute.xlu0 %436
      %v439 = vmul.f32 %v310, %v437
      %v440 = vmul.f32 %v315, %v437
      %v441 = vmul.f32 %v318, %v437
      %v442 = vmul.f32 %v321, %v437
      %443 = vrot.lane.b32.xlu0 %v328, 32
      %v444 = vpop.permute.xlu0 %443
      %v446 = vmul.f32 %v310, %v444
      %v447 = vmul.f32 %v315, %v444
      %v448 = vmul.f32 %v318, %v444
      %v449 = vmul.f32 %v321, %v444
      %454 = vrot.lane.b32.xlu0 %v446, 4
      %v455 = vpop.permute.xlu0 %454
      %456 = vrot.lane.b32.xlu0 %v447, 4
      %v457 = vpop.permute.xlu0 %456
      %458 = vrot.lane.b32.xlu0 %v448, 4
      %v459 = vpop.permute.xlu0 %458
      %460 = vrot.lane.b32.xlu0 %v449, 4
      %v461 = vpop.permute.xlu0 %460
      %v466 = vadd.f32 %v439, %v455
      %v467 = vadd.f32 %v440, %v457
      %v468 = vadd.f32 %v441, %v459
      %v469 = vadd.f32 %v442, %v461
      %474 = vrot.lane.b32.xlu0 %v432, 96
      %v475 = vpop.permute.xlu0 %474
      %476 = vrot.lane.b32.xlu0 %v433, 96
      %v477 = vpop.permute.xlu0 %476
      %478 = vrot.lane.b32.xlu0 %v434, 96
      %v479 = vpop.permute.xlu0 %478
      %480 = vrot.lane.b32.xlu0 %v435, 96
      %v481 = vpop.permute.xlu0 %480
      %490 = vrot.lane.b32.xlu0 %v466, 96
      %v491 = vpop.permute.xlu0 %490
      %492 = vrot.lane.b32.xlu0 %v467, 96
      %v493 = vpop.permute.xlu0 %492
      %494 = vrot.lane.b32.xlu0 %v468, 96
      %v495 = vpop.permute.xlu0 %494
      %496 = vrot.lane.b32.xlu0 %v469, 96
      %v497 = vpop.permute.xlu0 %496
      %v502 = vsel %vm393, %v475, %v491
      %v503 = vsel %vm393, %v477, %v493
      %v504 = vsel %vm393, %v479, %v495
      %v505 = vsel %vm393, %v481, %v497
      %v506 = vpack.c.bf16 %v502, %v502
      %v507 = vpack.c.bf16 %v503, %v503
      %v508 = vpack.c.bf16 %v504, %v504
      %v509 = vpack.c.bf16 %v505, %v505
      %v510 = vlaneseq
      %v511 = vshrl.u32 %v510, 7
      %v512 = vlaneseq
      %v513 = vand.u32 %v512, 127
      %vm514 = vcmp.le.s32.totalorder %v513, %v511
      %vm515 = vcmask 64512
      %v517 = vsel %vm515, %v398, 0
      %v520 = vsel %vm515, %v506, 0
      %522 = vmatpush.bf16.xpose.msra.mxu0 0
      %523 = vmatpush.bf16.xpose.msra.mxu0 0
      %524 = vmatpush.bf16.xpose.msra.mxu0 0
      %525 = vmatpush.bf16.xpose.msra.mxu0 0
      %526 = vmatpush.bf16.xpose.msra.mxu0 0
      %527 = vmatpush.bf16.xpose.msra.mxu0 0
      %528 = vmatpush.bf16.xpose.msra.mxu0 0
      %529 = vmatpush.bf16.xpose.msra.mxu0 %v520
      %530 = vmatmul.bf16.gmra.mxu0 %v517
      %v531 = vpop.f32.mrf.mxu0
      %v532 = vadd.f32 0.0, %v531
      %v533 = vpop.f32.mrf.mxu0
      %534 = vdwg.mxu0
      %v536 = vsel %vm515, %v399, 0
      %v539 = vsel %vm515, %v507, 0
      %541 = vmatpush.bf16.xpose.msra.mxu0 0
      %542 = vmatpush.bf16.xpose.msra.mxu0 0
      %543 = vmatpush.bf16.xpose.msra.mxu0 0
      %544 = vmatpush.bf16.xpose.msra.mxu0 0
      %545 = vmatpush.bf16.xpose.msra.mxu0 0
      %546 = vmatpush.bf16.xpose.msra.mxu0 0
      %547 = vmatpush.bf16.xpose.msra.mxu0 0
      %548 = vmatpush.bf16.xpose.msra.mxu0 %v539
      %549 = vmatmul.bf16.gmra.mxu0 %v536
      %v550 = vpop.f32.mrf.mxu0
      %v551 = vadd.f32 0.0, %v550
      %v552 = vpop.f32.mrf.mxu0
      %553 = vdwg.mxu0
      %v555 = vsel %vm515, %v400, 0
      %v558 = vsel %vm515, %v508, 0
      %560 = vmatpush.bf16.xpose.msra.mxu0 0
      %561 = vmatpush.bf16.xpose.msra.mxu0 0
      %562 = vmatpush.bf16.xpose.msra.mxu0 0
      %563 = vmatpush.bf16.xpose.msra.mxu0 0
      %564 = vmatpush.bf16.xpose.msra.mxu0 0
      %565 = vmatpush.bf16.xpose.msra.mxu0 0
      %566 = vmatpush.bf16.xpose.msra.mxu0 0
      %567 = vmatpush.bf16.xpose.msra.mxu0 %v558
      %568 = vmatmul.bf16.gmra.mxu0 %v555
      %v569 = vpop.f32.mrf.mxu0
      %v570 = vadd.f32 0.0, %v569
      %v571 = vpop.f32.mrf.mxu0
      %572 = vdwg.mxu0
      %v574 = vsel %vm515, %v401, 0
      %v577 = vsel %vm515, %v509, 0
      %579 = vmatpush.bf16.xpose.msra.mxu0 0
      %580 = vmatpush.bf16.xpose.msra.mxu0 0
      %581 = vmatpush.bf16.xpose.msra.mxu0 0
      %582 = vmatpush.bf16.xpose.msra.mxu0 0
      %583 = vmatpush.bf16.xpose.msra.mxu0 0
      %584 = vmatpush.bf16.xpose.msra.mxu0 0
      %585 = vmatpush.bf16.xpose.msra.mxu0 0
      %586 = vmatpush.bf16.xpose.msra.mxu0 %v577
      %587 = vmatmul.bf16.gmra.mxu0 %v574
      %v588 = vpop.f32.mrf.mxu0
      %v589 = vadd.f32 0.0, %v588
      %v590 = vpop.f32.mrf.mxu0
      %591 = vdwg.mxu0
      %v592 = vsel %vm514, 1, 0
      %vm593 = vcmp.eq.s32.totalorder %v592, 1
      %v594 = vsel %vm593, %v532, -1.7014117e+38
      %v595 = vsel %vm593, %v551, -1.7014117e+38
      %v596 = vsel %vm593, %v570, -1.7014117e+38
      %v597 = vsel %vm593, %v589, -1.7014117e+38
      %v598 = vsel %vm515, %v594, -inf
      %599 = vmax.xlane.f32.xlu0 %v598
      %v600 = vpop.xlane.xlu0 %599
      %v601 = vsel %vm515, %v595, -inf
      %602 = vmax.xlane.f32.xlu0 %v601
      %v603 = vpop.xlane.xlu0 %602
      %v604 = vsel %vm515, %v596, -inf
      %605 = vmax.xlane.f32.xlu0 %v604
      %v606 = vpop.xlane.xlu0 %605
      %v607 = vsel %vm515, %v597, -inf
      %608 = vmax.xlane.f32.xlu0 %v607
      %v609 = vpop.xlane.xlu0 %608
      %v610 = vsub.f32 %v594, %v600
      %v611 = vsub.f32 %v595, %v603
      %v612 = vsub.f32 %v596, %v606
      %v613 = vsub.f32 %v597, %v609
      %v614 = vmul.f32 %v610, 1.442695
      %v615 = vpow.pop %v614
      %v616 = vmul.f32 %v611, 1.442695
      %v617 = vpow.pop %v616
      %v618 = vmul.f32 %v612, 1.442695
      %v619 = vpow.pop %v618
      %v620 = vmul.f32 %v613, 1.442695
      %v621 = vpow.pop %v620
      %v622 = vsel %vm515, %v615, 0.0
      %623 = vadd.xlane.f32.xlu0 %v622
      %v624 = vpop.xlane.xlu0 %623
      %v625 = vsel %vm515, %v617, 0.0
      %626 = vadd.xlane.f32.xlu0 %v625
      %v627 = vpop.xlane.xlu0 %626
      %v628 = vsel %vm515, %v619, 0.0
      %629 = vadd.xlane.f32.xlu0 %v628
      %v630 = vpop.xlane.xlu0 %629
      %v631 = vsel %vm515, %v621, 0.0
      %632 = vadd.xlane.f32.xlu0 %v631
      %v633 = vpop.xlane.xlu0 %632
      %v634 = vrcp.pop %v624
      %v635 = vrcp.pop %v627
      %v636 = vrcp.pop %v630
      %v637 = vrcp.pop %v633
      %v638 = vmul.f32 %v615, %v634
      %v639 = vmul.f32 %v617, %v635
      %v640 = vmul.f32 %v619, %v636
      %v641 = vmul.f32 %v621, %v637
      %v642 = vpack.c.bf16 %v638, %v638
      %v643 = vpack.c.bf16 %v639, %v639
      %v644 = vpack.c.bf16 %v640, %v640
      %v645 = vpack.c.bf16 %v641, %v641
      %v647 = vunpack.c.l.b16 %v323
      %v648 = vpack.c.b16 %v647, %v647
      %649 = vrot.lane.b32.xlu0 %v648, 64
      %v650 = vpop.permute.xlu0 %649
      %v652 = vsel %vm515, %v642, 0
      %vm654 = vcmask 1043456
      %v656 = vsel %vm654, %v650, 0
      %658 = vmatpush.bf16.msra.mxu0 0
      %659 = vmatpush.bf16.msra.mxu0 0
      %660 = vmatpush.bf16.msra.mxu0 0
      %661 = vmatpush.bf16.msra.mxu0 0
      %662 = vmatpush.bf16.msra.mxu0 0
      %663 = vmatpush.bf16.msra.mxu0 0
      %664 = vmatpush.bf16.msra.mxu0 0
      %665 = vmatpush.bf16.msra.mxu0 %v656
      %666 = vmatmul.bf16.gmra.mxu0 %v652
      %v667 = vpop.f32.mrf.mxu0
      %v668 = vadd.f32 0.0, %v667
      %v669 = vpop.f32.mrf.mxu0
      %670 = vdwg.mxu0
      %v672 = vunpack.c.l.b16 %v324
      %v673 = vpack.c.b16 %v672, %v672
      %674 = vrot.lane.b32.xlu0 %v673, 64
      %v675 = vpop.permute.xlu0 %674
      %v677 = vsel %vm515, %v643, 0
      %v680 = vsel %vm654, %v675, 0
      %682 = vmatpush.bf16.msra.mxu0 0
      %683 = vmatpush.bf16.msra.mxu0 0
      %684 = vmatpush.bf16.msra.mxu0 0
      %685 = vmatpush.bf16.msra.mxu0 0
      %686 = vmatpush.bf16.msra.mxu0 0
      %687 = vmatpush.bf16.msra.mxu0 0
      %688 = vmatpush.bf16.msra.mxu0 0
      %689 = vmatpush.bf16.msra.mxu0 %v680
      %690 = vmatmul.bf16.gmra.mxu0 %v677
      %v691 = vpop.f32.mrf.mxu0
      %v692 = vadd.f32 0.0, %v691
      %v693 = vpop.f32.mrf.mxu0
      %694 = vdwg.mxu0
      %v696 = vunpack.c.l.b16 %v325
      %v697 = vpack.c.b16 %v696, %v696
      %698 = vrot.lane.b32.xlu0 %v697, 64
      %v699 = vpop.permute.xlu0 %698
      %v701 = vsel %vm515, %v644, 0
      %v704 = vsel %vm654, %v699, 0
      %706 = vmatpush.bf16.msra.mxu0 0
      %707 = vmatpush.bf16.msra.mxu0 0
      %708 = vmatpush.bf16.msra.mxu0 0
      %709 = vmatpush.bf16.msra.mxu0 0
      %710 = vmatpush.bf16.msra.mxu0 0
      %711 = vmatpush.bf16.msra.mxu0 0
      %712 = vmatpush.bf16.msra.mxu0 0
      %713 = vmatpush.bf16.msra.mxu0 %v704
      %714 = vmatmul.bf16.gmra.mxu0 %v701
      %v715 = vpop.f32.mrf.mxu0
      %v716 = vadd.f32 0.0, %v715
      %v717 = vpop.f32.mrf.mxu0
      %718 = vdwg.mxu0
      %v720 = vunpack.c.l.b16 %v326
      %v721 = vpack.c.b16 %v720, %v720
      %722 = vrot.lane.b32.xlu0 %v721, 64
      %v723 = vpop.permute.xlu0 %722
      %v725 = vsel %vm515, %v645, 0
      %v728 = vsel %vm654, %v723, 0
      %730 = vmatpush.bf16.msra.mxu0 0
      %731 = vmatpush.bf16.msra.mxu0 0
      %732 = vmatpush.bf16.msra.mxu0 0
      %733 = vmatpush.bf16.msra.mxu0 0
      %734 = vmatpush.bf16.msra.mxu0 0
      %735 = vmatpush.bf16.msra.mxu0 0
      %736 = vmatpush.bf16.msra.mxu0 0
      %737 = vmatpush.bf16.msra.mxu0 %v728
      %738 = vmatmul.bf16.gmra.mxu0 %v725
      %v739 = vpop.f32.mrf.mxu0
      %v740 = vadd.f32 0.0, %v739
      %v741 = vpop.f32.mrf.mxu0
      %742 = vdwg.mxu0
      %744 = vrot.lane.b32.xlu0 %v692, 8
      %v745 = vpop.permute.xlu0 %744
      %748 = vrot.lane.b32.xlu0 %v716, 16
      %v749 = vpop.permute.xlu0 %748
      %752 = vrot.lane.b32.xlu0 %v740, 24
      %v753 = vpop.permute.xlu0 %752
      %v755 = vsel %vm515, %v668, %v745
      %vm756 = vcmask 130048
      %v757 = vsel %vm756, %v755, %v749
      %vm758 = vcmask 195584
      %v759 = vsel %vm758, %v757, %v753
      %v760 = vpack.c.bf16 %v759, %v759
      %v761 = vld [vmem:[%s3] sm:$0xf]
      %v762 = vld [vmem:[%s3 + $0x4] sm:$0xf]
      %v763 = vld [vmem:[%s3 + $0x8] sm:$0xf]
      %v764 = vld [vmem:[%s3 + $0xc] sm:$0xf]
      %v769 = vunpack.c.l.b16 %v761
      %v770 = vunpack.c.l.b16 %v762
      %v771 = vunpack.c.l.b16 %v763
      %v772 = vunpack.c.l.b16 %v764
      %v773 = vpack.c.b16 %v770, %v769
      %v774 = vpack.c.b16 %v772, %v771
      %v778 = vsel %vm251, %v760, 0
      %780 = vmatpush.bf16.msra.mxu0 0
      %781 = vmatpush.bf16.msra.mxu0 0
      %782 = vmatpush.bf16.msra.mxu0 0
      %783 = vmatpush.bf16.msra.mxu0 0
      %784 = vmatpush.bf16.msra.mxu0 0
      %785 = vmatpush.bf16.msra.mxu0 0
      %786 = vmatpush.bf16.msra.mxu0 %v774
      %787 = vmatpush.bf16.msra.mxu0 %v773
      %788 = vmatmul.bf16.gmra.mxu0 %v778
      %v789 = vpop.f32.mrf.mxu0
      %v790 = vadd.f32 0.0, %v789
      %v791 = vpop.f32.mrf.mxu0
      %792 = vdwg.mxu0
      %v793 = vadd.f32 %v249, %v790
      %v794 = vpack.c.bf16 %v793, %v793
      %vm795 = vcmask 257024
      %796 = vst.msk [vmem:[%s246] sm:$0xf] %vm795, %v794
      %p797 = scmp.lt.s32.totalorder %s17, 1
      %s798 = scalar_select %p797, %s17, 1
      %s799 = smul.addr %s798, 4
      %s800 = scalar_lea.vmem %s6, %s799
      // Predicated region
      $region45: #{transformer_forward.5} parent=43 // pred_check
        %p801 = pneg %p166
      $region46: #{transformer_forward.5} parent=43 // pred_check_branch
        %803 = sbr.rel (%p801) target = $region48
      $region47: #{transformer_forward.5} parent=43 // pred_region
        _
      $region48: #{transformer_forward.5} parent=43 // pred_fallthru
        _
    $region44: #{transformer_forward.5} parent=5 // pred_fallthru
      _
    %p804 = scmp.le.s32.totalorder 2, %s12
    // Predicated region
    $region49: #{transformer_forward.5} parent=5 // pred_check
      %p805 = pneg %p804
    $region50: #{transformer_forward.5} parent=5 // pred_check_branch
      %807 = sbr.rel (%p805) target = $region52
    $region51: #{transformer_forward.5} parent=5 // pred_region
      %s808 = ssub.s32 %s12, 2
      // Predicated region
      $region53: #{transformer_forward.5} parent=51 // pred_check
        %p809 = pneg %p172
      $region54: #{transformer_forward.5} parent=51 // pred_check_branch
        %811 = sbr.rel (%p809) target = $region56
      $region55: #{transformer_forward.5} parent=51 // pred_region
        %p812 = scmp.lt.s32.totalorder %s18, 1
        %s813 = scalar_select %p812, %s18, 1
        %s814 = smul.addr %s813, 4
        %s815 = scalar_lea.vmem %s6, %s814
      $region56: #{transformer_forward.5} parent=51 // pred_fallthru
        _
    $region52: #{transformer_forward.5} parent=5 // pred_fallthru
      _
  $region6: #{transformer_forward.5} parent=0 // loop_footer
    %s16 = sadd.s32 1, %s12
  $region7: #{transformer_forward.5} parent=0 // loop_footer_branch
    %11 = sbr.rel target = $region3
  $region8: #{transformer_forward.5} parent=0 // loop_exit
    _

</llo_original>
